<compile_context>
chip_gen: v7x
topology: tpu7x:2x2x1
jax: 0.10.0
libtpu: 0.0.40
codegen_flags: <defaults>
</compile_context>

<pallas_src>
import jax
import jax.numpy as jnp
import numpy as np
from jax.experimental import pallas as pl
from jax.experimental.pallas import tpu as pltpu

INPUT_SIZE = 5     # features_for_prediction
HIDDEN = 50        # hidden_size
HP = 128           # padded per-gate hidden width (lane aligned)
IP = 8             # padded input feature width
OP = 128           # padded fc output width (lane-dense output)


def _round_up(n, m):
    return ((n + m - 1) // m) * m


# --------------------------------------------------------------------------- #
# Pallas kernel: full bi-LSTM(last step) + FC forward in one invocation.
# --------------------------------------------------------------------------- #
def bilstm_fc_kernel(x_ref, wih_f_ref, whh_f_ref, b_f_ref,
                     wih_b_ref, b_b_ref,
                     wfc_f_ref, wfc_b_ref, bfc_ref,
                     out_ref):
    TB = x_ref.shape[0]
    Hp = whh_f_ref.shape[0]
    Bp = out_ref.shape[0]
    T = TB // Bp

    x_all = x_ref[...]                                   # (T*Bp, IP)

    # ---- backward direction -------------------------------------------------
    # out[:, -1, H:] equals the reverse pass after its FIRST step (zero initial
    # state): a single cell step on x[T-1]; the h @ Whh_b term vanishes (h0=0)
    # and the forget gate is irrelevant (c0=0).  Done before the forward loop.
    x_last = x_all[(T - 1) * Bp:T * Bp, :]
    g_b = (jnp.dot(x_last, wih_b_ref[...], preferred_element_type=jnp.float32)
           + b_b_ref[...])
    i_b = jax.nn.sigmoid(g_b[:, 0 * Hp:1 * Hp])
    gg_b = jnp.tanh(g_b[:, 2 * Hp:3 * Hp])
    o_b = jax.nn.sigmoid(g_b[:, 3 * Hp:4 * Hp])
    h_b = o_b * jnp.tanh(i_b * gg_b)
    # Backward half of the FC (plus bias) — independent of the forward loop.
    acc = (jnp.dot(h_b, wfc_b_ref[...], preferred_element_type=jnp.float32)
           + bfc_ref[...])

    # ---- forward direction --------------------------------------------------
    # Hoisted input projection (+ fused bias) for all timesteps: one
    # (T*Bp, IP) x (IP, 4*Hp) matmul outside the serial chain.
    proj = (jnp.dot(x_all, wih_f_ref[...], preferred_element_type=jnp.float32)
            + b_f_ref[...])                              # (T*Bp, 4*Hp)
    whh_f = whh_f_ref[...]

    h = jnp.zeros((Bp, Hp), jnp.float32)
    c = jnp.zeros((Bp, Hp), jnp.float32)
    # T is static -> fully unrolled loop (per the perf review) so gate-slice
    # extracts, EUP pushes and MXU pops interleave across iterations.
    for t in range(T):
        g_t = proj[t * Bp:(t + 1) * Bp, :]
        if t > 0:                    # h == 0 at t == 0: skip dead matmul
            g_t = g_t + jnp.dot(h, whh_f, preferred_element_type=jnp.float32)
        i_g = jax.nn.sigmoid(g_t[:, 0 * Hp:1 * Hp])
        f_g = jax.nn.sigmoid(g_t[:, 1 * Hp:2 * Hp])
        gg = jnp.tanh(g_t[:, 2 * Hp:3 * Hp])
        o_g = jax.nn.sigmoid(g_t[:, 3 * Hp:4 * Hp])
        c = f_g * c + i_g * gg
        h = o_g * jnp.tanh(c)

    # TODO(synk): nn.Dropout is identity in eval mode; no stochastic mask applied.
    out_ref[...] = acc + jnp.dot(h, wfc_f_ref[...],
                                 preferred_element_type=jnp.float32)


# --------------------------------------------------------------------------- #
# One-time, host-side weight packing (OUTSIDE the jitted path).
# --------------------------------------------------------------------------- #
def _pack_lstm_dir(w_ih, w_hh, b_ih, b_hh):
    H, I = HIDDEN, INPUT_SIZE
    w_ih = np.asarray(w_ih, np.float32)
    w_hh = np.asarray(w_hh, np.float32)
    b = np.asarray(b_ih, np.float32) + np.asarray(b_hh, np.float32)
    wih_p = np.zeros((IP, 4 * HP), np.float32)
    whh_p = np.zeros((HP, 4 * HP), np.float32)
    b_p = np.zeros((1, 4 * HP), np.float32)
    for g in range(4):                        # PyTorch gate order: i, f, g, o
        wih_p[:I, g * HP:g * HP + H] = w_ih[g * H:(g + 1) * H, :].T
        whh_p[:H, g * HP:g * HP + H] = w_hh[g * H:(g + 1) * H, :].T
        b_p[0, g * HP:g * HP + H] = b[g * H:(g + 1) * H]
    return wih_p, whh_p, b_p


def pack_params(params):
    """Pack nn.Module-layout params into padded kernel layout (call once)."""
    wih_f, whh_f, b_f = _pack_lstm_dir(params["w_ih_f"], params["w_hh_f"],
                                       params["b_ih_f"], params["b_hh_f"])
    # Backward direction only runs one step from zero state in the kernel,
    # so Whh_b is never used and is not packed / not passed.
    wih_b, _, b_b = _pack_lstm_dir(params["w_ih_b"], params["w_hh_b"],
                                   params["b_ih_b"], params["b_hh_b"])
    fc_w = np.asarray(params["fc_w"], np.float32)          # (5, 100)
    wfc_f = np.zeros((HP, OP), np.float32)
    wfc_b = np.zeros((HP, OP), np.float32)
    wfc_f[:HIDDEN, :INPUT_SIZE] = fc_w[:, :HIDDEN].T
    wfc_b[:HIDDEN, :INPUT_SIZE] = fc_w[:, HIDDEN:].T
    bfc = np.zeros((1, OP), np.float32)
    bfc[0, :INPUT_SIZE] = np.asarray(params["fc_b"], np.float32)
    return {
        "wih_f": jnp.asarray(wih_f), "whh_f": jnp.asarray(whh_f),
        "b_f": jnp.asarray(b_f),
        "wih_b": jnp.asarray(wih_b), "b_b": jnp.asarray(b_b),
        "wfc_f": jnp.asarray(wfc_f), "wfc_b": jnp.asarray(wfc_b),
        "bfc": jnp.asarray(bfc),
    }


def init_params(key):
    """Deterministic params mirroring the nn.Module shapes (PyTorch layout)."""
    ks = jax.random.split(key, 10)
    bound = 1.0 / np.sqrt(HIDDEN)
    u = lambda k, shape, b: jax.random.uniform(k, shape, jnp.float32, -b, b)
    p = {}
    p["w_ih_f"] = u(ks[0], (4 * HIDDEN, INPUT_SIZE), bound)
    p["w_hh_f"] = u(ks[1], (4 * HIDDEN, HIDDEN), bound)
    p["b_ih_f"] = u(ks[2], (4 * HIDDEN,), bound)
    p["b_hh_f"] = u(ks[3], (4 * HIDDEN,), bound)
    p["w_ih_b"] = u(ks[4], (4 * HIDDEN, INPUT_SIZE), bound)
    p["w_hh_b"] = u(ks[5], (4 * HIDDEN, HIDDEN), bound)
    p["b_ih_b"] = u(ks[6], (4 * HIDDEN,), bound)
    p["b_hh_b"] = u(ks[7], (4 * HIDDEN,), bound)
    fb = 1.0 / np.sqrt(2 * HIDDEN)
    p["fc_w"] = u(ks[8], (INPUT_SIZE, 2 * HIDDEN), fb)
    p["fc_b"] = u(ks[9], (INPUT_SIZE,), fb)
    return p


# --------------------------------------------------------------------------- #
# Jitted forward: only traced ops here; packed weights passed pre-padded.
# --------------------------------------------------------------------------- #
@jax.jit
def bilstm_forward(x, packed):
    """x: (B, T, INPUT_SIZE) float32 -> (B, INPUT_SIZE) float32 (eval mode)."""
    B, T, I = x.shape
    assert I == INPUT_SIZE
    BP = _round_up(B, 8)                                   # sublane-aligned batch
    # Time-major, zero-padded, flattened to (T*BP, IP): each timestep is an
    # aligned 8-row sublane tile.
    x_tm = jnp.transpose(x, (1, 0, 2))                     # (T, B, I)
    x_pad = jnp.zeros((T, BP, IP), jnp.float32).at[:, :B, :I].set(x_tm)
    x_flat = x_pad.reshape(T * BP, IP)

    vmem = pl.BlockSpec(memory_space=pltpu.MemorySpace.VMEM)
    out_pad = pl.pallas_call(
        bilstm_fc_kernel,
        out_shape=jax.ShapeDtypeStruct((BP, OP), jnp.float32),
        in_specs=[vmem] * 9,
        out_specs=vmem,
    )(x_flat, packed["wih_f"], packed["whh_f"], packed["b_f"],
      packed["wih_b"], packed["b_b"],
      packed["wfc_f"], packed["wfc_b"], packed["bfc"])
    return out_pad[:B, :INPUT_SIZE]


# --------------------------------------------------------------------------- #
# Pure-JAX reference mirroring the PyTorch module exactly (full reverse pass).
# --------------------------------------------------------------------------- #
def reference_forward(x, params):
    H = HIDDEN

    def cell(x_t, h, c, w_ih, w_hh, b_ih, b_hh):
        gates = x_t @ w_ih.T + h @ w_hh.T + b_ih + b_hh
        i = jax.nn.sigmoid(gates[:, 0 * H:1 * H])
        f = jax.nn.sigmoid(gates[:, 1 * H:2 * H])
        g = jnp.tanh(gates[:, 2 * H:3 * H])
        o = jax.nn.sigmoid(gates[:, 3 * H:4 * H])
        c = f * c + i * g
        return o * jnp.tanh(c), c

    B, T, _ = x.shape
    h = jnp.zeros((B, H)); c = jnp.zeros((B, H))
    fwd = []
    for t in range(T):
        h, c = cell(x[:, t, :], h, c, params["w_ih_f"], params["w_hh_f"],
                    params["b_ih_f"], params["b_hh_f"])
        fwd.append(h)
    h = jnp.zeros((B, H)); c = jnp.zeros((B, H))
    bwd = [None] * T
    for t in range(T - 1, -1, -1):
        h, c = cell(x[:, t, :], h, c, params["w_ih_b"], params["w_hh_b"],
                    params["b_ih_b"], params["b_hh_b"])
        bwd[t] = h
    out_last = jnp.concatenate([fwd[-1], bwd[-1]], axis=-1)   # out[:, -1, :]
    return out_last @ params["fc_w"].T + params["fc_b"]       # dropout = identity


if __name__ == "__main__":
    key = jax.random.PRNGKey(0)
    k_x, k_p = jax.random.split(key)
    B, T = 2, 8
    x = jax.random.normal(k_x, (B, T, INPUT_SIZE), jnp.float32)
    params = init_params(k_p)
    packed = pack_params(params)          # host-side, once, outside jit

    out = bilstm_forward(x, packed)
    out = jax.block_until_ready(out)

    ref = reference_forward(x, params)
    np.testing.assert_allclose(np.asarray(out), np.asarray(ref),
                               rtol=1e-4, atol=1e-4)
    print("KERNEL_OK")
</pallas_src>

<mosaic_0001>
module attributes {stable_mosaic.version = 11 : i64} {
  func.func @bilstm_fc_kernel(%arg0: memref<64x8xf32, #tpu.memory_space<vmem>>, %arg1: memref<8x512xf32, #tpu.memory_space<vmem>>, %arg2: memref<128x512xf32, #tpu.memory_space<vmem>>, %arg3: memref<1x512xf32, #tpu.memory_space<vmem>>, %arg4: memref<8x512xf32, #tpu.memory_space<vmem>>, %arg5: memref<1x512xf32, #tpu.memory_space<vmem>>, %arg6: memref<128x128xf32, #tpu.memory_space<vmem>>, %arg7: memref<128x128xf32, #tpu.memory_space<vmem>>, %arg8: memref<1x128xf32, #tpu.memory_space<vmem>>, %arg9: memref<8x128xf32, #tpu.memory_space<vmem>>) attributes {dimension_semantics = [], scalar_prefetch = 0 : i64, scratch_operands = 0 : i64, tpu.core_type = #tpu.core_type<tc>} {
    %c0 = arith.constant 0 : index
    %c0_0 = arith.constant 0 : index
    %0 = vector.load %arg0[%c0, %c0_0] : memref<64x8xf32, #tpu.memory_space<vmem>>, vector<64x8xf32>
    %1 = vector.extract_strided_slice %0 {offsets = [56, 0], sizes = [8, 8], strides = [1, 1]} : vector<64x8xf32> to vector<8x8xf32>
    %c0_1 = arith.constant 0 : index
    %c0_2 = arith.constant 0 : index
    %2 = vector.load %arg4[%c0_1, %c0_2] : memref<8x512xf32, #tpu.memory_space<vmem>>, vector<8x512xf32>
    %cst = arith.constant dense<0.000000e+00> : vector<8x512xf32>
    %3 = tpu.matmul %1, %2, %cst {dimension_numbers = #tpu.dot_dimension_numbers<[1], [0], [0], [1], [0, 0, 1, 1], [], []>} : vector<8x8xf32>, vector<8x512xf32>, vector<8x512xf32> -> vector<8x512xf32>
    %c0_3 = arith.constant 0 : index
    %c0_4 = arith.constant 0 : index
    %4 = vector.load %arg5[%c0_3, %c0_4] : memref<1x512xf32, #tpu.memory_space<vmem>>, vector<1x512xf32>
    %5 = vector.broadcast %4 : vector<1x512xf32> to vector<8x512xf32>
    %6 = arith.addf %3, %5 : vector<8x512xf32>
    %7 = vector.extract_strided_slice %6 {offsets = [0, 0], sizes = [8, 128], strides = [1, 1]} : vector<8x512xf32> to vector<8x128xf32>
    %8 = arith.negf %7 : vector<8x128xf32>
    %9 = math.exp %8 : vector<8x128xf32>
    %cst_5 = arith.constant 1.000000e+00 : f32
    %10 = vector.broadcast %cst_5 : f32 to vector<8x128xf32>
    %11 = arith.addf %10, %9 : vector<8x128xf32>
    %12 = arith.divf %10, %11 : vector<8x128xf32>
    %13 = vector.extract_strided_slice %6 {offsets = [0, 256], sizes = [8, 128], strides = [1, 1]} : vector<8x512xf32> to vector<8x128xf32>
    %14 = math.tanh %13 : vector<8x128xf32>
    %15 = vector.extract_strided_slice %6 {offsets = [0, 384], sizes = [8, 128], strides = [1, 1]} : vector<8x512xf32> to vector<8x128xf32>
    %16 = arith.negf %15 : vector<8x128xf32>
    %17 = math.exp %16 : vector<8x128xf32>
    %cst_6 = arith.constant 1.000000e+00 : f32
    %18 = vector.broadcast %cst_6 : f32 to vector<8x128xf32>
    %19 = arith.addf %18, %17 : vector<8x128xf32>
    %20 = arith.divf %18, %19 : vector<8x128xf32>
    %21 = arith.mulf %12, %14 : vector<8x128xf32>
    %22 = math.tanh %21 : vector<8x128xf32>
    %23 = arith.mulf %20, %22 : vector<8x128xf32>
    %c0_7 = arith.constant 0 : index
    %c0_8 = arith.constant 0 : index
    %24 = vector.load %arg7[%c0_7, %c0_8] : memref<128x128xf32, #tpu.memory_space<vmem>>, vector<128x128xf32>
    %cst_9 = arith.constant dense<0.000000e+00> : vector<8x128xf32>
    %25 = tpu.matmul %23, %24, %cst_9 {dimension_numbers = #tpu.dot_dimension_numbers<[1], [0], [0], [1], [0, 0, 1, 1], [], []>} : vector<8x128xf32>, vector<128x128xf32>, vector<8x128xf32> -> vector<8x128xf32>
    %c0_10 = arith.constant 0 : index
    %c0_11 = arith.constant 0 : index
    %26 = vector.load %arg8[%c0_10, %c0_11] : memref<1x128xf32, #tpu.memory_space<vmem>>, vector<1x128xf32>
    %27 = vector.broadcast %26 : vector<1x128xf32> to vector<8x128xf32>
    %28 = arith.addf %25, %27 : vector<8x128xf32>
    %c0_12 = arith.constant 0 : index
    %c0_13 = arith.constant 0 : index
    %29 = vector.load %arg1[%c0_12, %c0_13] : memref<8x512xf32, #tpu.memory_space<vmem>>, vector<8x512xf32>
    %cst_14 = arith.constant dense<0.000000e+00> : vector<64x512xf32>
    %30 = tpu.matmul %0, %29, %cst_14 {dimension_numbers = #tpu.dot_dimension_numbers<[1], [0], [0], [1], [0, 0, 1, 1], [], []>} : vector<64x8xf32>, vector<8x512xf32>, vector<64x512xf32> -> vector<64x512xf32>
    %c0_15 = arith.constant 0 : index
    %c0_16 = arith.constant 0 : index
    %31 = vector.load %arg3[%c0_15, %c0_16] : memref<1x512xf32, #tpu.memory_space<vmem>>, vector<1x512xf32>
    %32 = vector.broadcast %31 : vector<1x512xf32> to vector<64x512xf32>
    %33 = arith.addf %30, %32 : vector<64x512xf32>
    %c0_17 = arith.constant 0 : index
    %c0_18 = arith.constant 0 : index
    %34 = vector.load %arg2[%c0_17, %c0_18] : memref<128x512xf32, #tpu.memory_space<vmem>>, vector<128x512xf32>
    %cst_19 = arith.constant 0.000000e+00 : f32
    %35 = vector.broadcast %cst_19 : f32 to vector<8x128xf32>
    %36 = vector.extract_strided_slice %33 {offsets = [0, 0], sizes = [8, 512], strides = [1, 1]} : vector<64x512xf32> to vector<8x512xf32>
    %37 = vector.extract_strided_slice %36 {offsets = [0, 0], sizes = [8, 128], strides = [1, 1]} : vector<8x512xf32> to vector<8x128xf32>
    %38 = arith.negf %37 : vector<8x128xf32>
    %39 = math.exp %38 : vector<8x128xf32>
    %cst_20 = arith.constant 1.000000e+00 : f32
    %40 = vector.broadcast %cst_20 : f32 to vector<8x128xf32>
    %41 = arith.addf %40, %39 : vector<8x128xf32>
    %42 = arith.divf %40, %41 : vector<8x128xf32>
    %43 = vector.extract_strided_slice %36 {offsets = [0, 128], sizes = [8, 128], strides = [1, 1]} : vector<8x512xf32> to vector<8x128xf32>
    %44 = arith.negf %43 : vector<8x128xf32>
    %45 = math.exp %44 : vector<8x128xf32>
    %cst_21 = arith.constant 1.000000e+00 : f32
    %46 = vector.broadcast %cst_21 : f32 to vector<8x128xf32>
    %47 = arith.addf %46, %45 : vector<8x128xf32>
    %48 = arith.divf %46, %47 : vector<8x128xf32>
    %49 = vector.extract_strided_slice %36 {offsets = [0, 256], sizes = [8, 128], strides = [1, 1]} : vector<8x512xf32> to vector<8x128xf32>
    %50 = math.tanh %49 : vector<8x128xf32>
    %51 = vector.extract_strided_slice %36 {offsets = [0, 384], sizes = [8, 128], strides = [1, 1]} : vector<8x512xf32> to vector<8x128xf32>
    %52 = arith.negf %51 : vector<8x128xf32>
    %53 = math.exp %52 : vector<8x128xf32>
    %cst_22 = arith.constant 1.000000e+00 : f32
    %54 = vector.broadcast %cst_22 : f32 to vector<8x128xf32>
    %55 = arith.addf %54, %53 : vector<8x128xf32>
    %56 = arith.divf %54, %55 : vector<8x128xf32>
    %57 = arith.mulf %48, %35 : vector<8x128xf32>
    %58 = arith.mulf %42, %50 : vector<8x128xf32>
    %59 = arith.addf %57, %58 : vector<8x128xf32>
    %60 = math.tanh %59 : vector<8x128xf32>
    %61 = arith.mulf %56, %60 : vector<8x128xf32>
    %62 = vector.extract_strided_slice %33 {offsets = [8, 0], sizes = [8, 512], strides = [1, 1]} : vector<64x512xf32> to vector<8x512xf32>
    %cst_23 = arith.constant dense<0.000000e+00> : vector<8x512xf32>
    %63 = tpu.matmul %61, %34, %cst_23 {dimension_numbers = #tpu.dot_dimension_numbers<[1], [0], [0], [1], [0, 0, 1, 1], [], []>} : vector<8x128xf32>, vector<128x512xf32>, vector<8x512xf32> -> vector<8x512xf32>
    %64 = arith.addf %62, %63 : vector<8x512xf32>
    %65 = vector.extract_strided_slice %64 {offsets = [0, 0], sizes = [8, 128], strides = [1, 1]} : vector<8x512xf32> to vector<8x128xf32>
    %66 = arith.negf %65 : vector<8x128xf32>
    %67 = math.exp %66 : vector<8x128xf32>
    %cst_24 = arith.constant 1.000000e+00 : f32
    %68 = vector.broadcast %cst_24 : f32 to vector<8x128xf32>
    %69 = arith.addf %68, %67 : vector<8x128xf32>
    %70 = arith.divf %68, %69 : vector<8x128xf32>
    %71 = vector.extract_strided_slice %64 {offsets = [0, 128], sizes = [8, 128], strides = [1, 1]} : vector<8x512xf32> to vector<8x128xf32>
    %72 = arith.negf %71 : vector<8x128xf32>
    %73 = math.exp %72 : vector<8x128xf32>
    %cst_25 = arith.constant 1.000000e+00 : f32
    %74 = vector.broadcast %cst_25 : f32 to vector<8x128xf32>
    %75 = arith.addf %74, %73 : vector<8x128xf32>
    %76 = arith.divf %74, %75 : vector<8x128xf32>
    %77 = vector.extract_strided_slice %64 {offsets = [0, 256], sizes = [8, 128], strides = [1, 1]} : vector<8x512xf32> to vector<8x128xf32>
    %78 = math.tanh %77 : vector<8x128xf32>
    %79 = vector.extract_strided_slice %64 {offsets = [0, 384], sizes = [8, 128], strides = [1, 1]} : vector<8x512xf32> to vector<8x128xf32>
    %80 = arith.negf %79 : vector<8x128xf32>
    %81 = math.exp %80 : vector<8x128xf32>
    %cst_26 = arith.constant 1.000000e+00 : f32
    %82 = vector.broadcast %cst_26 : f32 to vector<8x128xf32>
    %83 = arith.addf %82, %81 : vector<8x128xf32>
    %84 = arith.divf %82, %83 : vector<8x128xf32>
    %85 = arith.mulf %76, %59 : vector<8x128xf32>
    %86 = arith.mulf %70, %78 : vector<8x128xf32>
    %87 = arith.addf %85, %86 : vector<8x128xf32>
    %88 = math.tanh %87 : vector<8x128xf32>
    %89 = arith.mulf %84, %88 : vector<8x128xf32>
    %90 = vector.extract_strided_slice %33 {offsets = [16, 0], sizes = [8, 512], strides = [1, 1]} : vector<64x512xf32> to vector<8x512xf32>
    %cst_27 = arith.constant dense<0.000000e+00> : vector<8x512xf32>
    %91 = tpu.matmul %89, %34, %cst_27 {dimension_numbers = #tpu.dot_dimension_numbers<[1], [0], [0], [1], [0, 0, 1, 1], [], []>} : vector<8x128xf32>, vector<128x512xf32>, vector<8x512xf32> -> vector<8x512xf32>
    %92 = arith.addf %90, %91 : vector<8x512xf32>
    %93 = vector.extract_strided_slice %92 {offsets = [0, 0], sizes = [8, 128], strides = [1, 1]} : vector<8x512xf32> to vector<8x128xf32>
    %94 = arith.negf %93 : vector<8x128xf32>
    %95 = math.exp %94 : vector<8x128xf32>
    %cst_28 = arith.constant 1.000000e+00 : f32
    %96 = vector.broadcast %cst_28 : f32 to vector<8x128xf32>
    %97 = arith.addf %96, %95 : vector<8x128xf32>
    %98 = arith.divf %96, %97 : vector<8x128xf32>
    %99 = vector.extract_strided_slice %92 {offsets = [0, 128], sizes = [8, 128], strides = [1, 1]} : vector<8x512xf32> to vector<8x128xf32>
    %100 = arith.negf %99 : vector<8x128xf32>
    %101 = math.exp %100 : vector<8x128xf32>
    %cst_29 = arith.constant 1.000000e+00 : f32
    %102 = vector.broadcast %cst_29 : f32 to vector<8x128xf32>
    %103 = arith.addf %102, %101 : vector<8x128xf32>
    %104 = arith.divf %102, %103 : vector<8x128xf32>
    %105 = vector.extract_strided_slice %92 {offsets = [0, 256], sizes = [8, 128], strides = [1, 1]} : vector<8x512xf32> to vector<8x128xf32>
    %106 = math.tanh %105 : vector<8x128xf32>
    %107 = vector.extract_strided_slice %92 {offsets = [0, 384], sizes = [8, 128], strides = [1, 1]} : vector<8x512xf32> to vector<8x128xf32>
    %108 = arith.negf %107 : vector<8x128xf32>
    %109 = math.exp %108 : vector<8x128xf32>
    %cst_30 = arith.constant 1.000000e+00 : f32
    %110 = vector.broadcast %cst_30 : f32 to vector<8x128xf32>
    %111 = arith.addf %110, %109 : vector<8x128xf32>
    %112 = arith.divf %110, %111 : vector<8x128xf32>
    %113 = arith.mulf %104, %87 : vector<8x128xf32>
    %114 = arith.mulf %98, %106 : vector<8x128xf32>
    %115 = arith.addf %113, %114 : vector<8x128xf32>
    %116 = math.tanh %115 : vector<8x128xf32>
    %117 = arith.mulf %112, %116 : vector<8x128xf32>
    %118 = vector.extract_strided_slice %33 {offsets = [24, 0], sizes = [8, 512], strides = [1, 1]} : vector<64x512xf32> to vector<8x512xf32>
    %cst_31 = arith.constant dense<0.000000e+00> : vector<8x512xf32>
    %119 = tpu.matmul %117, %34, %cst_31 {dimension_numbers = #tpu.dot_dimension_numbers<[1], [0], [0], [1], [0, 0, 1, 1], [], []>} : vector<8x128xf32>, vector<128x512xf32>, vector<8x512xf32> -> vector<8x512xf32>
    %120 = arith.addf %118, %119 : vector<8x512xf32>
    %121 = vector.extract_strided_slice %120 {offsets = [0, 0], sizes = [8, 128], strides = [1, 1]} : vector<8x512xf32> to vector<8x128xf32>
    %122 = arith.negf %121 : vector<8x128xf32>
    %123 = math.exp %122 : vector<8x128xf32>
    %cst_32 = arith.constant 1.000000e+00 : f32
    %124 = vector.broadcast %cst_32 : f32 to vector<8x128xf32>
    %125 = arith.addf %124, %123 : vector<8x128xf32>
    %126 = arith.divf %124, %125 : vector<8x128xf32>
    %127 = vector.extract_strided_slice %120 {offsets = [0, 128], sizes = [8, 128], strides = [1, 1]} : vector<8x512xf32> to vector<8x128xf32>
    %128 = arith.negf %127 : vector<8x128xf32>
    %129 = math.exp %128 : vector<8x128xf32>
    %cst_33 = arith.constant 1.000000e+00 : f32
    %130 = vector.broadcast %cst_33 : f32 to vector<8x128xf32>
    %131 = arith.addf %130, %129 : vector<8x128xf32>
    %132 = arith.divf %130, %131 : vector<8x128xf32>
    %133 = vector.extract_strided_slice %120 {offsets = [0, 256], sizes = [8, 128], strides = [1, 1]} : vector<8x512xf32> to vector<8x128xf32>
    %134 = math.tanh %133 : vector<8x128xf32>
    %135 = vector.extract_strided_slice %120 {offsets = [0, 384], sizes = [8, 128], strides = [1, 1]} : vector<8x512xf32> to vector<8x128xf32>
    %136 = arith.negf %135 : vector<8x128xf32>
    %137 = math.exp %136 : vector<8x128xf32>
    %cst_34 = arith.constant 1.000000e+00 : f32
    %138 = vector.broadcast %cst_34 : f32 to vector<8x128xf32>
    %139 = arith.addf %138, %137 : vector<8x128xf32>
    %140 = arith.divf %138, %139 : vector<8x128xf32>
    %141 = arith.mulf %132, %115 : vector<8x128xf32>
    %142 = arith.mulf %126, %134 : vector<8x128xf32>
    %143 = arith.addf %141, %142 : vector<8x128xf32>
    %144 = math.tanh %143 : vector<8x128xf32>
    %145 = arith.mulf %140, %144 : vector<8x128xf32>
    %146 = vector.extract_strided_slice %33 {offsets = [32, 0], sizes = [8, 512], strides = [1, 1]} : vector<64x512xf32> to vector<8x512xf32>
    %cst_35 = arith.constant dense<0.000000e+00> : vector<8x512xf32>
    %147 = tpu.matmul %145, %34, %cst_35 {dimension_numbers = #tpu.dot_dimension_numbers<[1], [0], [0], [1], [0, 0, 1, 1], [], []>} : vector<8x128xf32>, vector<128x512xf32>, vector<8x512xf32> -> vector<8x512xf32>
    %148 = arith.addf %146, %147 : vector<8x512xf32>
    %149 = vector.extract_strided_slice %148 {offsets = [0, 0], sizes = [8, 128], strides = [1, 1]} : vector<8x512xf32> to vector<8x128xf32>
    %150 = arith.negf %149 : vector<8x128xf32>
    %151 = math.exp %150 : vector<8x128xf32>
    %cst_36 = arith.constant 1.000000e+00 : f32
    %152 = vector.broadcast %cst_36 : f32 to vector<8x128xf32>
    %153 = arith.addf %152, %151 : vector<8x128xf32>
    %154 = arith.divf %152, %153 : vector<8x128xf32>
    %155 = vector.extract_strided_slice %148 {offsets = [0, 128], sizes = [8, 128], strides = [1, 1]} : vector<8x512xf32> to vector<8x128xf32>
    %156 = arith.negf %155 : vector<8x128xf32>
    %157 = math.exp %156 : vector<8x128xf32>
    %cst_37 = arith.constant 1.000000e+00 : f32
    %158 = vector.broadcast %cst_37 : f32 to vector<8x128xf32>
    %159 = arith.addf %158, %157 : vector<8x128xf32>
    %160 = arith.divf %158, %159 : vector<8x128xf32>
    %161 = vector.extract_strided_slice %148 {offsets = [0, 256], sizes = [8, 128], strides = [1, 1]} : vector<8x512xf32> to vector<8x128xf32>
    %162 = math.tanh %161 : vector<8x128xf32>
    %163 = vector.extract_strided_slice %148 {offsets = [0, 384], sizes = [8, 128], strides = [1, 1]} : vector<8x512xf32> to vector<8x128xf32>
    %164 = arith.negf %163 : vector<8x128xf32>
    %165 = math.exp %164 : vector<8x128xf32>
    %cst_38 = arith.constant 1.000000e+00 : f32
    %166 = vector.broadcast %cst_38 : f32 to vector<8x128xf32>
    %167 = arith.addf %166, %165 : vector<8x128xf32>
    %168 = arith.divf %166, %167 : vector<8x128xf32>
    %169 = arith.mulf %160, %143 : vector<8x128xf32>
    %170 = arith.mulf %154, %162 : vector<8x128xf32>
    %171 = arith.addf %169, %170 : vector<8x128xf32>
    %172 = math.tanh %171 : vector<8x128xf32>
    %173 = arith.mulf %168, %172 : vector<8x128xf32>
    %174 = vector.extract_strided_slice %33 {offsets = [40, 0], sizes = [8, 512], strides = [1, 1]} : vector<64x512xf32> to vector<8x512xf32>
    %cst_39 = arith.constant dense<0.000000e+00> : vector<8x512xf32>
    %175 = tpu.matmul %173, %34, %cst_39 {dimension_numbers = #tpu.dot_dimension_numbers<[1], [0], [0], [1], [0, 0, 1, 1], [], []>} : vector<8x128xf32>, vector<128x512xf32>, vector<8x512xf32> -> vector<8x512xf32>
    %176 = arith.addf %174, %175 : vector<8x512xf32>
    %177 = vector.extract_strided_slice %176 {offsets = [0, 0], sizes = [8, 128], strides = [1, 1]} : vector<8x512xf32> to vector<8x128xf32>
    %178 = arith.negf %177 : vector<8x128xf32>
    %179 = math.exp %178 : vector<8x128xf32>
    %cst_40 = arith.constant 1.000000e+00 : f32
    %180 = vector.broadcast %cst_40 : f32 to vector<8x128xf32>
    %181 = arith.addf %180, %179 : vector<8x128xf32>
    %182 = arith.divf %180, %181 : vector<8x128xf32>
    %183 = vector.extract_strided_slice %176 {offsets = [0, 128], sizes = [8, 128], strides = [1, 1]} : vector<8x512xf32> to vector<8x128xf32>
    %184 = arith.negf %183 : vector<8x128xf32>
    %185 = math.exp %184 : vector<8x128xf32>
    %cst_41 = arith.constant 1.000000e+00 : f32
    %186 = vector.broadcast %cst_41 : f32 to vector<8x128xf32>
    %187 = arith.addf %186, %185 : vector<8x128xf32>
    %188 = arith.divf %186, %187 : vector<8x128xf32>
    %189 = vector.extract_strided_slice %176 {offsets = [0, 256], sizes = [8, 128], strides = [1, 1]} : vector<8x512xf32> to vector<8x128xf32>
    %190 = math.tanh %189 : vector<8x128xf32>
    %191 = vector.extract_strided_slice %176 {offsets = [0, 384], sizes = [8, 128], strides = [1, 1]} : vector<8x512xf32> to vector<8x128xf32>
    %192 = arith.negf %191 : vector<8x128xf32>
    %193 = math.exp %192 : vector<8x128xf32>
    %cst_42 = arith.constant 1.000000e+00 : f32
    %194 = vector.broadcast %cst_42 : f32 to vector<8x128xf32>
    %195 = arith.addf %194, %193 : vector<8x128xf32>
    %196 = arith.divf %194, %195 : vector<8x128xf32>
    %197 = arith.mulf %188, %171 : vector<8x128xf32>
    %198 = arith.mulf %182, %190 : vector<8x128xf32>
    %199 = arith.addf %197, %198 : vector<8x128xf32>
    %200 = math.tanh %199 : vector<8x128xf32>
    %201 = arith.mulf %196, %200 : vector<8x128xf32>
    %202 = vector.extract_strided_slice %33 {offsets = [48, 0], sizes = [8, 512], strides = [1, 1]} : vector<64x512xf32> to vector<8x512xf32>
    %cst_43 = arith.constant dense<0.000000e+00> : vector<8x512xf32>
    %203 = tpu.matmul %201, %34, %cst_43 {dimension_numbers = #tpu.dot_dimension_numbers<[1], [0], [0], [1], [0, 0, 1, 1], [], []>} : vector<8x128xf32>, vector<128x512xf32>, vector<8x512xf32> -> vector<8x512xf32>
    %204 = arith.addf %202, %203 : vector<8x512xf32>
    %205 = vector.extract_strided_slice %204 {offsets = [0, 0], sizes = [8, 128], strides = [1, 1]} : vector<8x512xf32> to vector<8x128xf32>
    %206 = arith.negf %205 : vector<8x128xf32>
    %207 = math.exp %206 : vector<8x128xf32>
    %cst_44 = arith.constant 1.000000e+00 : f32
    %208 = vector.broadcast %cst_44 : f32 to vector<8x128xf32>
    %209 = arith.addf %208, %207 : vector<8x128xf32>
    %210 = arith.divf %208, %209 : vector<8x128xf32>
    %211 = vector.extract_strided_slice %204 {offsets = [0, 128], sizes = [8, 128], strides = [1, 1]} : vector<8x512xf32> to vector<8x128xf32>
    %212 = arith.negf %211 : vector<8x128xf32>
    %213 = math.exp %212 : vector<8x128xf32>
    %cst_45 = arith.constant 1.000000e+00 : f32
    %214 = vector.broadcast %cst_45 : f32 to vector<8x128xf32>
    %215 = arith.addf %214, %213 : vector<8x128xf32>
    %216 = arith.divf %214, %215 : vector<8x128xf32>
    %217 = vector.extract_strided_slice %204 {offsets = [0, 256], sizes = [8, 128], strides = [1, 1]} : vector<8x512xf32> to vector<8x128xf32>
    %218 = math.tanh %217 : vector<8x128xf32>
    %219 = vector.extract_strided_slice %204 {offsets = [0, 384], sizes = [8, 128], strides = [1, 1]} : vector<8x512xf32> to vector<8x128xf32>
    %220 = arith.negf %219 : vector<8x128xf32>
    %221 = math.exp %220 : vector<8x128xf32>
    %cst_46 = arith.constant 1.000000e+00 : f32
    %222 = vector.broadcast %cst_46 : f32 to vector<8x128xf32>
    %223 = arith.addf %222, %221 : vector<8x128xf32>
    %224 = arith.divf %222, %223 : vector<8x128xf32>
    %225 = arith.mulf %216, %199 : vector<8x128xf32>
    %226 = arith.mulf %210, %218 : vector<8x128xf32>
    %227 = arith.addf %225, %226 : vector<8x128xf32>
    %228 = math.tanh %227 : vector<8x128xf32>
    %229 = arith.mulf %224, %228 : vector<8x128xf32>
    %230 = vector.extract_strided_slice %33 {offsets = [56, 0], sizes = [8, 512], strides = [1, 1]} : vector<64x512xf32> to vector<8x512xf32>
    %cst_47 = arith.constant dense<0.000000e+00> : vector<8x512xf32>
    %231 = tpu.matmul %229, %34, %cst_47 {dimension_numbers = #tpu.dot_dimension_numbers<[1], [0], [0], [1], [0, 0, 1, 1], [], []>} : vector<8x128xf32>, vector<128x512xf32>, vector<8x512xf32> -> vector<8x512xf32>
    %232 = arith.addf %230, %231 : vector<8x512xf32>
    %233 = vector.extract_strided_slice %232 {offsets = [0, 0], sizes = [8, 128], strides = [1, 1]} : vector<8x512xf32> to vector<8x128xf32>
    %234 = arith.negf %233 : vector<8x128xf32>
    %235 = math.exp %234 : vector<8x128xf32>
    %cst_48 = arith.constant 1.000000e+00 : f32
    %236 = vector.broadcast %cst_48 : f32 to vector<8x128xf32>
    %237 = arith.addf %236, %235 : vector<8x128xf32>
    %238 = arith.divf %236, %237 : vector<8x128xf32>
    %239 = vector.extract_strided_slice %232 {offsets = [0, 128], sizes = [8, 128], strides = [1, 1]} : vector<8x512xf32> to vector<8x128xf32>
    %240 = arith.negf %239 : vector<8x128xf32>
    %241 = math.exp %240 : vector<8x128xf32>
    %cst_49 = arith.constant 1.000000e+00 : f32
    %242 = vector.broadcast %cst_49 : f32 to vector<8x128xf32>
    %243 = arith.addf %242, %241 : vector<8x128xf32>
    %244 = arith.divf %242, %243 : vector<8x128xf32>
    %245 = vector.extract_strided_slice %232 {offsets = [0, 256], sizes = [8, 128], strides = [1, 1]} : vector<8x512xf32> to vector<8x128xf32>
    %246 = math.tanh %245 : vector<8x128xf32>
    %247 = vector.extract_strided_slice %232 {offsets = [0, 384], sizes = [8, 128], strides = [1, 1]} : vector<8x512xf32> to vector<8x128xf32>
    %248 = arith.negf %247 : vector<8x128xf32>
    %249 = math.exp %248 : vector<8x128xf32>
    %cst_50 = arith.constant 1.000000e+00 : f32
    %250 = vector.broadcast %cst_50 : f32 to vector<8x128xf32>
    %251 = arith.addf %250, %249 : vector<8x128xf32>
    %252 = arith.divf %250, %251 : vector<8x128xf32>
    %253 = arith.mulf %244, %227 : vector<8x128xf32>
    %254 = arith.mulf %238, %246 : vector<8x128xf32>
    %255 = arith.addf %253, %254 : vector<8x128xf32>
    %256 = math.tanh %255 : vector<8x128xf32>
    %257 = arith.mulf %252, %256 : vector<8x128xf32>
    %c0_51 = arith.constant 0 : index
    %c0_52 = arith.constant 0 : index
    %258 = vector.load %arg6[%c0_51, %c0_52] : memref<128x128xf32, #tpu.memory_space<vmem>>, vector<128x128xf32>
    %cst_53 = arith.constant dense<0.000000e+00> : vector<8x128xf32>
    %259 = tpu.matmul %257, %258, %cst_53 {dimension_numbers = #tpu.dot_dimension_numbers<[1], [0], [0], [1], [0, 0, 1, 1], [], []>} : vector<8x128xf32>, vector<128x128xf32>, vector<8x128xf32> -> vector<8x128xf32>
    %260 = arith.addf %28, %259 : vector<8x128xf32>
    %c0_54 = arith.constant 0 : index
    %c0_55 = arith.constant 0 : index
    %261 = vector.load %arg9[%c0_54, %c0_55] : memref<8x128xf32, #tpu.memory_space<vmem>>, vector<8x128xf32>
    tpu.vector_store %arg9[%c0_54, %c0_55], %260 {strides = array<i32>} : memref<8x128xf32, #tpu.memory_space<vmem>>, vector<8x128xf32>,
    return
  }
}

</mosaic_0001>

<llo_original>
// kernel: bilstm_forward.1
$region0: #{bilstm_forward.1}
  #allocation0 [shape = 'u32[]', space=smem, size = 0x4, offset = 0x4, fixed_abs, tag = 'smem constant byte address 0x4 - core index']
  #allocation1 [shape = 'u32[144,128]{1,0:T(1,128)}', space=vmem, size = 0x12000, scoped, tag = 'internal scratch']
  %s0 = inlined_call_operand.vmem [shape: f32[64,8], index: 0, kind: input, shape index: {}]
  %s1 = inlined_call_operand.hbm [shape: f32[8,512], index: 1, kind: input, shape index: {}]
  %s2 = inlined_call_operand.hbm [shape: f32[128,512], index: 2, kind: input, shape index: {}]
  %s3 = inlined_call_operand.hbm [shape: f32[1,512], index: 3, kind: input, shape index: {}]
  %s4 = inlined_call_operand.hbm [shape: f32[8,512], index: 4, kind: input, shape index: {}]
  %s5 = inlined_call_operand.hbm [shape: f32[1,512], index: 5, kind: input, shape index: {}]
  %s6 = inlined_call_operand.vmem [shape: f32[128,128], index: 6, kind: input, shape index: {}]
  %s7 = inlined_call_operand.hbm [shape: f32[128,128], index: 7, kind: input, shape index: {}]
  %s8 = inlined_call_operand.hbm [shape: f32[1,128], index: 8, kind: input, shape index: {}]
  %s9 = inlined_call_operand.vmem [shape: f32[8,128], index: 9, kind: output, shape index: {}]
  %s10 = sld [smem:[#allocation0]]
  $region74: #{bilstm_forward.1} parent=0
    _
  %s12 = ssub.s32 1, %s10
  %s13 = scalar_select 0, %s12, %s10
  $region1: #{bilstm_forward.1} parent=0
    #allocation2 [shape = 'u8[16384]{0}', space=vmem, size = 0x4000, scoped, tag = 'input window, operand 1, single buffered']
    #allocation3 [shape = 's32[1]{0}', space=sflag, size = 0x4, scoped, tag = 'scoped memory for bilstm_forward.1']
    #allocation4 [shape = 'u8[262144]{0}', space=vmem, size = 0x40000, scoped, tag = 'input window, operand 2, single buffered']
    #allocation5 [shape = 's32[1]{0}', space=sflag, size = 0x4, scoped, tag = 'scoped memory for bilstm_forward.1']
    #allocation6 [shape = 'u8[2048]{0}', space=vmem, size = 0x800, scoped, tag = 'input window, operand 3, single buffered']
    #allocation7 [shape = 'u8[16384]{0}', space=vmem, size = 0x4000, scoped, tag = 'input window, operand 4, single buffered']
    #allocation8 [shape = 's32[1]{0}', space=sflag, size = 0x4, scoped, tag = 'scoped memory for bilstm_forward.1']
    #allocation9 [shape = 'u8[2048]{0}', space=vmem, size = 0x800, scoped, tag = 'input window, operand 5, single buffered']
    #allocation10 [shape = 'u8[65536]{0}', space=vmem, size = 0x10000, scoped, tag = 'input window, operand 7, single buffered']
    #allocation11 [shape = 's32[1]{0}', space=sflag, size = 0x4, scoped, tag = 'scoped memory for bilstm_forward.1']
    #allocation12 [shape = 'u8[512]{0}', space=vmem, size = 0x400, scoped, tag = 'input window, operand 8, single buffered']
    %14 = vsyncpa [#allocation3], 0
    %15 = vsyncpa [#allocation5], 0
    %16 = vsyncpa [#allocation8], 0
    %17 = vsyncpa [#allocation11], 0
    // Predicated region
    $region2: #{bilstm_forward.1} parent=1 // pred_check
      _
    $region3: #{bilstm_forward.1} parent=1 // pred_check_branch
      %19 = sbr.rel (0) target = $region5
    $region4: #{bilstm_forward.1} parent=1 // pred_region
      _
    $region5: #{bilstm_forward.1} parent=1 // pred_fallthru
      _
    // Predicated region
    $region6: #{bilstm_forward.1} parent=1 // pred_check
      _
    $region7: #{bilstm_forward.1} parent=1 // pred_check_branch
      %21 = sbr.rel (0) target = $region9
    $region8: #{bilstm_forward.1} parent=1 // pred_region
      %s23 = ssub.s32 512, 512
      %24 = vsyncadd [#allocation3], %s23
      %s26 = sshll.u32 [#allocation2], 4
      %s27 = int_to_ptr.vmem [resolvable:$true] %s26
      %29 = dma.hbm_to_vmem [thread:$0]  %s1, 512, %s27, [#allocation3]
    $region9: #{bilstm_forward.1} parent=1 // pred_fallthru
      _
    // Predicated region
    $region10: #{bilstm_forward.1} parent=1 // pred_check
      _
    $region11: #{bilstm_forward.1} parent=1 // pred_check_branch
      %31 = sbr.rel (0) target = $region13
    $region12: #{bilstm_forward.1} parent=1 // pred_region
      %s33 = ssub.s32 8192, 8192
      %34 = vsyncadd [#allocation5], %s33
      %s35 = sshll.u32 [#allocation4], 4
      %s36 = int_to_ptr.vmem [resolvable:$true] %s35
      %41 = dma.hbm_to_vmem [thread:$0]  %s2, 8192, %s36, [#allocation5], 512, 512, 32
    $region13: #{bilstm_forward.1} parent=1 // pred_fallthru
      _
    // Predicated region
    $region14: #{bilstm_forward.1} parent=1 // pred_check
      _
    $region15: #{bilstm_forward.1} parent=1 // pred_check_branch
      %43 = sbr.rel (0) target = $region17
    $region16: #{bilstm_forward.1} parent=1 // pred_region
      %s45 = ssub.s32 64, 64
      %46 = vsyncadd [#allocation5], %s45
      %s48 = sshll.u32 [#allocation6], 4
      %s49 = int_to_ptr.vmem [resolvable:$true] %s48
      %51 = dma.hbm_to_vmem [thread:$0]  %s3, 64, %s49, [#allocation5]
    $region17: #{bilstm_forward.1} parent=1 // pred_fallthru
      _
    // Predicated region
    $region18: #{bilstm_forward.1} parent=1 // pred_check
      _
    $region19: #{bilstm_forward.1} parent=1 // pred_check_branch
      %53 = sbr.rel (0) target = $region21
    $region20: #{bilstm_forward.1} parent=1 // pred_region
      %s55 = ssub.s32 512, 512
      %56 = vsyncadd [#allocation8], %s55
      %s58 = sshll.u32 [#allocation7], 4
      %s59 = int_to_ptr.vmem [resolvable:$true] %s58
      %61 = dma.hbm_to_vmem [thread:$0]  %s4, 512, %s59, [#allocation8]
    $region21: #{bilstm_forward.1} parent=1 // pred_fallthru
      _
    // Predicated region
    $region22: #{bilstm_forward.1} parent=1 // pred_check
      _
    $region23: #{bilstm_forward.1} parent=1 // pred_check_branch
      %63 = sbr.rel (0) target = $region25
    $region24: #{bilstm_forward.1} parent=1 // pred_region
      %s65 = ssub.s32 64, 64
      %66 = vsyncadd [#allocation8], %s65
      %s68 = sshll.u32 [#allocation9], 4
      %s69 = int_to_ptr.vmem [resolvable:$true] %s68
      %71 = dma.hbm_to_vmem [thread:$0]  %s5, 64, %s69, [#allocation8]
    $region25: #{bilstm_forward.1} parent=1 // pred_fallthru
      _
    // Predicated region
    $region26: #{bilstm_forward.1} parent=1 // pred_check
      _
    $region27: #{bilstm_forward.1} parent=1 // pred_check_branch
      %73 = sbr.rel (0) target = $region29
    $region28: #{bilstm_forward.1} parent=1 // pred_region
      _
    $region29: #{bilstm_forward.1} parent=1 // pred_fallthru
      _
    // Predicated region
    $region30: #{bilstm_forward.1} parent=1 // pred_check
      _
    $region31: #{bilstm_forward.1} parent=1 // pred_check_branch
      %75 = sbr.rel (0) target = $region33
    $region32: #{bilstm_forward.1} parent=1 // pred_region
      %s77 = ssub.s32 2048, 2048
      %78 = vsyncadd [#allocation11], %s77
      %s79 = sshll.u32 [#allocation10], 4
      %s80 = int_to_ptr.vmem [resolvable:$true] %s79
      %85 = dma.hbm_to_vmem [thread:$0]  %s7, 2048, %s80, [#allocation11], 128, 128, 8
    $region33: #{bilstm_forward.1} parent=1 // pred_fallthru
      _
    // Predicated region
    $region34: #{bilstm_forward.1} parent=1 // pred_check
      _
    $region35: #{bilstm_forward.1} parent=1 // pred_check_branch
      %87 = sbr.rel (0) target = $region37
    $region36: #{bilstm_forward.1} parent=1 // pred_region
      %s89 = ssub.s32 16, 16
      %90 = vsyncadd [#allocation11], %s89
      %s92 = sshll.u32 [#allocation12], 4
      %s93 = int_to_ptr.vmem [resolvable:$true] %s92
      %95 = dma.hbm_to_vmem [thread:$0]  %s8, 16, %s93, [#allocation11]
    $region37: #{bilstm_forward.1} parent=1 // pred_fallthru
      _
    // Predicated region
    $region38: #{bilstm_forward.1} parent=1 // pred_check
      _
    $region39: #{bilstm_forward.1} parent=1 // pred_check_branch
      %97 = sbr.rel (0) target = $region41
    $region40: #{bilstm_forward.1} parent=1 // pred_region
      %98 = dma.done [#allocation3], 512
    $region41: #{bilstm_forward.1} parent=1 // pred_fallthru
      _
    // Predicated region
    $region42: #{bilstm_forward.1} parent=1 // pred_check
      _
    $region43: #{bilstm_forward.1} parent=1 // pred_check_branch
      %100 = sbr.rel (0) target = $region45
    $region44: #{bilstm_forward.1} parent=1 // pred_region
      %101 = dma.done [#allocation5], 8192
    $region45: #{bilstm_forward.1} parent=1 // pred_fallthru
      _
    // Predicated region
    $region46: #{bilstm_forward.1} parent=1 // pred_check
      _
    $region47: #{bilstm_forward.1} parent=1 // pred_check_branch
      %103 = sbr.rel (0) target = $region49
    $region48: #{bilstm_forward.1} parent=1 // pred_region
      %104 = dma.done [#allocation5], 64
    $region49: #{bilstm_forward.1} parent=1 // pred_fallthru
      _
    // Predicated region
    $region50: #{bilstm_forward.1} parent=1 // pred_check
      _
    $region51: #{bilstm_forward.1} parent=1 // pred_check_branch
      %106 = sbr.rel (0) target = $region53
    $region52: #{bilstm_forward.1} parent=1 // pred_region
      %107 = dma.done [#allocation8], 512
    $region53: #{bilstm_forward.1} parent=1 // pred_fallthru
      _
    // Predicated region
    $region54: #{bilstm_forward.1} parent=1 // pred_check
      _
    $region55: #{bilstm_forward.1} parent=1 // pred_check_branch
      %109 = sbr.rel (0) target = $region57
    $region56: #{bilstm_forward.1} parent=1 // pred_region
      %110 = dma.done [#allocation8], 64
    $region57: #{bilstm_forward.1} parent=1 // pred_fallthru
      _
    // Predicated region
    $region58: #{bilstm_forward.1} parent=1 // pred_check
      _
    $region59: #{bilstm_forward.1} parent=1 // pred_check_branch
      %112 = sbr.rel (0) target = $region61
    $region60: #{bilstm_forward.1} parent=1 // pred_region
      %113 = dma.done [#allocation11], 2048
    $region61: #{bilstm_forward.1} parent=1 // pred_fallthru
      _
    // Predicated region
    $region62: #{bilstm_forward.1} parent=1 // pred_check
      _
    $region63: #{bilstm_forward.1} parent=1 // pred_check_branch
      %115 = sbr.rel (0) target = $region65
    $region64: #{bilstm_forward.1} parent=1 // pred_region
      %116 = dma.done [#allocation11], 16
    $region65: #{bilstm_forward.1} parent=1 // pred_fallthru
      _
    %v117 = vld [vmem:[%s0] sm:$0xff]
    %v118 = vld [vmem:[%s0 + $0x8] sm:$0xff]
    %v119 = vld [vmem:[%s0 + $0x10] sm:$0xff]
    %v120 = vld [vmem:[%s0 + $0x18] sm:$0xff]
    %v121 = vld [vmem:[%s0 + $0x20] sm:$0xff]
    %v122 = vld [vmem:[%s0 + $0x28] sm:$0xff]
    %v123 = vld [vmem:[%s0 + $0x30] sm:$0xff]
    %v124 = vld [vmem:[%s0 + $0x38] sm:$0xff]
    %v125 = vld [vmem:[#allocation7] sm:$0xff]
    %v126 = vld [vmem:[#allocation7 + $0x8] sm:$0xff]
    %v127 = vld [vmem:[#allocation7 + $0x10] sm:$0xff]
    %v128 = vld [vmem:[#allocation7 + $0x18] sm:$0xff]
    %v129 = vld [vmem:[#allocation9] sm:$0xf]
    %v131 = vlaneseq
    %v132 = vshrl.u32 %v131, 7
    %v133 = vsub.s32 0, %v132
    %v134 = vrot.slane %v129, %v133
    %v135 = vlaneseq
    %v136 = vshrl.u32 %v135, 7
    %v137 = vsub.s32 2, %v136
    %v138 = vrot.slane %v129, %v137
    %v139 = vlaneseq
    %v140 = vshrl.u32 %v139, 7
    %v141 = vsub.s32 3, %v140
    %v142 = vrot.slane %v129, %v141
    %vm146 = vcmask 64512
    %v148 = vsel %vm146, %v124, 0
    %150 = vmatprep.subr.mxu0 %v126
    %151 = vmatpush1.msra.mxu0 %v125
    %152 = vmatprep.subr.mxu0 0.0
    %153 = vmatpush1.msra.mxu0 0.0
    %154 = vmatprep.subr.mxu0 0.0
    %155 = vmatpush1.msra.mxu0 0.0
    %156 = vmatprep.subr.mxu0 0.0
    %157 = vmatpush1.msra.mxu0 0.0
    %158 = vmatprep.subr.mxu0 0.0
    %159 = vmatpush1.msra.mxu0 0.0
    %160 = vmatprep.subr.mxu0 0.0
    %161 = vmatpush1.msra.mxu0 0.0
    %162 = vmatprep.subr.mxu0 0.0
    %163 = vmatpush1.msra.mxu0 0.0
    %164 = vmatprep.subr.mxu0 0.0
    %165 = vmatpush1.msra.mxu0 0.0
    %166 = vmatprep.subr.mxu0 0.0
    %167 = vmatpush1.msra.mxu0 0.0
    %168 = vmatprep.subr.mxu0 0.0
    %169 = vmatpush1.msra.mxu0 0.0
    %170 = vmatprep.subr.mxu0 0.0
    %171 = vmatpush1.msra.mxu0 0.0
    %172 = vmatprep.subr.mxu0 0.0
    %173 = vmatpush1.msra.mxu0 0.0
    %174 = vmatprep.subr.mxu0 0.0
    %175 = vmatpush1.msra.mxu0 0.0
    %176 = vmatprep.subr.mxu0 0.0
    %177 = vmatpush1.msra.mxu0 0.0
    %178 = vmatprep.subr.mxu0 0.0
    %179 = vmatpush1.msra.mxu0 0.0
    %180 = vmatprep.subr.mxu0 0.0
    %181 = vmatpush1.msra.mxu0 0.0
    %182 = vmatprep.subr.mxu0 0.0
    %183 = vmatpush1.msra.mxu0 0.0
    %184 = vmatprep.subr.mxu0 0.0
    %185 = vmatpush1.msra.mxu0 0.0
    %186 = vmatprep.subr.mxu0 0.0
    %187 = vmatpush1.msra.mxu0 0.0
    %188 = vmatprep.subr.mxu0 0.0
    %189 = vmatpush1.msra.mxu0 0.0
    %190 = vmatprep.subr.mxu0 0.0
    %191 = vmatpush1.msra.mxu0 0.0
    %192 = vmatprep.subr.mxu0 0.0
    %193 = vmatpush1.msra.mxu0 0.0
    %194 = vmatprep.subr.mxu0 0.0
    %195 = vmatpush1.msra.mxu0 0.0
    %196 = vmatprep.subr.mxu0 0.0
    %197 = vmatpush1.msra.mxu0 0.0
    %198 = vmatprep.subr.mxu0 0.0
    %199 = vmatpush1.msra.mxu0 0.0
    %200 = vmatprep.subr.mxu0 0.0
    %201 = vmatpush1.msra.mxu0 0.0
    %202 = vmatprep.subr.mxu0 0.0
    %203 = vmatpush1.msra.mxu0 0.0
    %204 = vmatprep.subr.mxu0 0.0
    %205 = vmatpush1.msra.mxu0 0.0
    %206 = vmatprep.subr.mxu0 0.0
    %207 = vmatpush1.msra.mxu0 0.0
    %208 = vmatprep.subr.mxu0 0.0
    %209 = vmatpush1.msra.mxu0 0.0
    %210 = vmatprep.subr.mxu0 0.0
    %211 = vmatpush1.msra.mxu0 0.0
    %212 = vmatprep.subr.mxu0 0.0
    %213 = vmatpush1.msra.mxu0 0.0
    %214 = vmatprep.mubr.f32.mxu0 0.0
    %215 = vmatmul.mubr.f32.gmra.mrb[0].mxu0 %v148
    %v216 = vpop.f32.mrb[0].mxu0
    %v217 = vadd.f32 %v134, %v216
    %v218 = vpop.f32.mrb[0].mxu0
    %219 = vdwg.mxu0
    %220 = vmatprep.subr.mxu0 %v128
    %221 = vmatpush1.msra.mxu0 %v127
    %222 = vmatprep.subr.mxu0 0.0
    %223 = vmatpush1.msra.mxu0 0.0
    %224 = vmatprep.subr.mxu0 0.0
    %225 = vmatpush1.msra.mxu0 0.0
    %226 = vmatprep.subr.mxu0 0.0
    %227 = vmatpush1.msra.mxu0 0.0
    %228 = vmatprep.subr.mxu0 0.0
    %229 = vmatpush1.msra.mxu0 0.0
    %230 = vmatprep.subr.mxu0 0.0
    %231 = vmatpush1.msra.mxu0 0.0
    %232 = vmatprep.subr.mxu0 0.0
    %233 = vmatpush1.msra.mxu0 0.0
    %234 = vmatprep.subr.mxu0 0.0
    %235 = vmatpush1.msra.mxu0 0.0
    %236 = vmatprep.subr.mxu0 0.0
    %237 = vmatpush1.msra.mxu0 0.0
    %238 = vmatprep.subr.mxu0 0.0
    %239 = vmatpush1.msra.mxu0 0.0
    %240 = vmatprep.subr.mxu0 0.0
    %241 = vmatpush1.msra.mxu0 0.0
    %242 = vmatprep.subr.mxu0 0.0
    %243 = vmatpush1.msra.mxu0 0.0
    %244 = vmatprep.subr.mxu0 0.0
    %245 = vmatpush1.msra.mxu0 0.0
    %246 = vmatprep.subr.mxu0 0.0
    %247 = vmatpush1.msra.mxu0 0.0
    %248 = vmatprep.subr.mxu0 0.0
    %249 = vmatpush1.msra.mxu0 0.0
    %250 = vmatprep.subr.mxu0 0.0
    %251 = vmatpush1.msra.mxu0 0.0
    %252 = vmatprep.subr.mxu0 0.0
    %253 = vmatpush1.msra.mxu0 0.0
    %254 = vmatprep.subr.mxu0 0.0
    %255 = vmatpush1.msra.mxu0 0.0
    %256 = vmatprep.subr.mxu0 0.0
    %257 = vmatpush1.msra.mxu0 0.0
    %258 = vmatprep.subr.mxu0 0.0
    %259 = vmatpush1.msra.mxu0 0.0
    %260 = vmatprep.subr.mxu0 0.0
    %261 = vmatpush1.msra.mxu0 0.0
    %262 = vmatprep.subr.mxu0 0.0
    %263 = vmatpush1.msra.mxu0 0.0
    %264 = vmatprep.subr.mxu0 0.0
    %265 = vmatpush1.msra.mxu0 0.0
    %266 = vmatprep.subr.mxu0 0.0
    %267 = vmatpush1.msra.mxu0 0.0
    %268 = vmatprep.subr.mxu0 0.0
    %269 = vmatpush1.msra.mxu0 0.0
    %270 = vmatprep.subr.mxu0 0.0
    %271 = vmatpush1.msra.mxu0 0.0
    %272 = vmatprep.subr.mxu0 0.0
    %273 = vmatpush1.msra.mxu0 0.0
    %274 = vmatprep.subr.mxu0 0.0
    %275 = vmatpush1.msra.mxu0 0.0
    %276 = vmatprep.subr.mxu0 0.0
    %277 = vmatpush1.msra.mxu0 0.0
    %278 = vmatprep.subr.mxu0 0.0
    %279 = vmatpush1.msra.mxu0 0.0
    %280 = vmatprep.subr.mxu0 0.0
    %281 = vmatpush1.msra.mxu0 0.0
    %282 = vmatprep.subr.mxu0 0.0
    %283 = vmatpush1.msra.mxu0 0.0
    %284 = vmatprep.mubr.f32.mxu0 0.0
    %285 = vmatmul.mubr.f32.gmra.mrb[0].mxu0 %v148
    %v286 = vpop.f32.mrb[0].mxu0
    %v287 = vadd.f32 %v138, %v286
    %v288 = vpop.f32.mrb[0].mxu0
    %v289 = vadd.f32 %v142, %v288
    %290 = vdwg.mxu0
    %v291 = vxor.u32 %v217, 2147483648
    %v292 = vmul.f32 %v291, 1.442695
    %v293 = vpow.pop %v292
    %v294 = vadd.f32 %v293, 1.0
    %v295 = vrcp.pop %v294
    %v296 = vmul.f32 1.0, %v295
    %v297 = vtanh.pop %v287
    %v298 = vxor.u32 %v289, 2147483648
    %v299 = vmul.f32 %v298, 1.442695
    %v300 = vpow.pop %v299
    %v301 = vadd.f32 %v300, 1.0
    %v302 = vrcp.pop %v301
    %v303 = vmul.f32 1.0, %v302
    %v304 = vmul.f32 %v296, %v297
    %v305 = vtanh.pop %v304
    %v306 = vmul.f32 %v303, %v305
    %v307 = vld [vmem:[#allocation10] sm:$0xff]
    %v308 = vld [vmem:[#allocation10 + $0x8] sm:$0xff]
    %v309 = vld [vmem:[#allocation10 + $0x10] sm:$0xff]
    %v310 = vld [vmem:[#allocation10 + $0x18] sm:$0xff]
    %v311 = vld [vmem:[#allocation10 + $0x20] sm:$0xff]
    %v312 = vld [vmem:[#allocation10 + $0x28] sm:$0xff]
    %v313 = vld [vmem:[#allocation10 + $0x30] sm:$0xff]
    %v314 = vld [vmem:[#allocation10 + $0x38] sm:$0xff]
    %v315 = vld [vmem:[#allocation10 + $0x40] sm:$0xff]
    %v316 = vld [vmem:[#allocation10 + $0x48] sm:$0xff]
    %v317 = vld [vmem:[#allocation10 + $0x50] sm:$0xff]
    %v318 = vld [vmem:[#allocation10 + $0x58] sm:$0xff]
    %v319 = vld [vmem:[#allocation10 + $0x60] sm:$0xff]
    %v320 = vld [vmem:[#allocation10 + $0x68] sm:$0xff]
    %v321 = vld [vmem:[#allocation10 + $0x70] sm:$0xff]
    %v322 = vld [vmem:[#allocation10 + $0x78] sm:$0xff]
    %v323 = vld [vmem:[#allocation12] sm:$0x1]
    %v325 = vlaneseq
    %v326 = vshrl.u32 %v325, 7
    %v327 = vsub.s32 0, %v326
    %v328 = vrot.slane %v323, %v327
    %330 = vmatprep.subr.mxu0 0.0
    %331 = vmatpush1.msra.mxu0 %v307
    %332 = vmatprep.subr.mxu0 0.0
    %333 = vmatpush1.msra.mxu0 %v308
    %334 = vmatprep.subr.mxu0 0.0
    %335 = vmatpush1.msra.mxu0 %v309
    %336 = vmatprep.subr.mxu0 0.0
    %337 = vmatpush1.msra.mxu0 %v310
    %338 = vmatprep.subr.mxu0 0.0
    %339 = vmatpush1.msra.mxu0 %v311
    %340 = vmatprep.subr.mxu0 0.0
    %341 = vmatpush1.msra.mxu0 %v312
    %342 = vmatprep.subr.mxu0 0.0
    %343 = vmatpush1.msra.mxu0 %v313
    %344 = vmatprep.subr.mxu0 0.0
    %345 = vmatpush1.msra.mxu0 %v314
    %346 = vmatprep.subr.mxu0 0.0
    %347 = vmatpush1.msra.mxu0 %v315
    %348 = vmatprep.subr.mxu0 0.0
    %349 = vmatpush1.msra.mxu0 %v316
    %350 = vmatprep.subr.mxu0 0.0
    %351 = vmatpush1.msra.mxu0 %v317
    %352 = vmatprep.subr.mxu0 0.0
    %353 = vmatpush1.msra.mxu0 %v318
    %354 = vmatprep.subr.mxu0 0.0
    %355 = vmatpush1.msra.mxu0 %v319
    %356 = vmatprep.subr.mxu0 0.0
    %357 = vmatpush1.msra.mxu0 %v320
    %358 = vmatprep.subr.mxu0 0.0
    %359 = vmatpush1.msra.mxu0 %v321
    %360 = vmatprep.subr.mxu0 0.0
    %361 = vmatpush1.msra.mxu0 %v322
    %362 = vmatprep.subr.mxu0 0.0
    %363 = vmatpush1.msra.mxu0 0.0
    %364 = vmatprep.subr.mxu0 0.0
    %365 = vmatpush1.msra.mxu0 0.0
    %366 = vmatprep.subr.mxu0 0.0
    %367 = vmatpush1.msra.mxu0 0.0
    %368 = vmatprep.subr.mxu0 0.0
    %369 = vmatpush1.msra.mxu0 0.0
    %370 = vmatprep.subr.mxu0 0.0
    %371 = vmatpush1.msra.mxu0 0.0
    %372 = vmatprep.subr.mxu0 0.0
    %373 = vmatpush1.msra.mxu0 0.0
    %374 = vmatprep.subr.mxu0 0.0
    %375 = vmatpush1.msra.mxu0 0.0
    %376 = vmatprep.subr.mxu0 0.0
    %377 = vmatpush1.msra.mxu0 0.0
    %378 = vmatprep.subr.mxu0 0.0
    %379 = vmatpush1.msra.mxu0 0.0
    %380 = vmatprep.subr.mxu0 0.0
    %381 = vmatpush1.msra.mxu0 0.0
    %382 = vmatprep.subr.mxu0 0.0
    %383 = vmatpush1.msra.mxu0 0.0
    %384 = vmatprep.subr.mxu0 0.0
    %385 = vmatpush1.msra.mxu0 0.0
    %386 = vmatprep.subr.mxu0 0.0
    %387 = vmatpush1.msra.mxu0 0.0
    %388 = vmatprep.subr.mxu0 0.0
    %389 = vmatpush1.msra.mxu0 0.0
    %390 = vmatprep.subr.mxu0 0.0
    %391 = vmatpush1.msra.mxu0 0.0
    %392 = vmatprep.subr.mxu0 0.0
    %393 = vmatpush1.msra.mxu0 0.0
    %394 = vmatprep.mubr.f32.mxu0 0.0
    %395 = vmatmul.mubr.f32.gmra.mrb[0].mxu0 %v306
    %v396 = vpop.f32.mrb[0].mxu0
    %v397 = vadd.f32 %v328, %v396
    %v398 = vpop.f32.mrb[0].mxu0
    %399 = vdwg.mxu0
    %v400 = vld [vmem:[#allocation2] sm:$0xff]
    %v401 = vld [vmem:[#allocation2 + $0x8] sm:$0xff]
    %v402 = vld [vmem:[#allocation2 + $0x10] sm:$0xff]
    %v403 = vld [vmem:[#allocation2 + $0x18] sm:$0xff]
    %v404 = vld [vmem:[#allocation6] sm:$0xf]
    %v406 = vlaneseq
    %v407 = vshrl.u32 %v406, 7
    %v408 = vsub.s32 0, %v407
    %v409 = vrot.slane %v404, %v408
    %v410 = vlaneseq
    %v411 = vshrl.u32 %v410, 7
    %v412 = vsub.s32 1, %v411
    %v413 = vrot.slane %v404, %v412
    %v414 = vlaneseq
    %v415 = vshrl.u32 %v414, 7
    %v416 = vsub.s32 2, %v415
    %v417 = vrot.slane %v404, %v416
    %v418 = vlaneseq
    %v419 = vshrl.u32 %v418, 7
    %v420 = vsub.s32 3, %v419
    %v421 = vrot.slane %v404, %v420
    %v427 = vsel %vm146, %v117, 0
    %v430 = vsel %vm146, %v118, 0
    %v433 = vsel %vm146, %v119, 0
    %v436 = vsel %vm146, %v120, 0
    %v439 = vsel %vm146, %v121, 0
    %v442 = vsel %vm146, %v122, 0
    %v445 = vsel %vm146, %v123, 0
    %447 = vmatprep.subr.mxu0 %v401
    %448 = vmatpush1.msra.mxu0 %v400
    %449 = vmatprep.subr.mxu0 0.0
    %450 = vmatpush1.msra.mxu0 0.0
    %451 = vmatprep.subr.mxu0 0.0
    %452 = vmatpush1.msra.mxu0 0.0
    %453 = vmatprep.subr.mxu0 0.0
    %454 = vmatpush1.msra.mxu0 0.0
    %455 = vmatprep.subr.mxu0 0.0
    %456 = vmatpush1.msra.mxu0 0.0
    %457 = vmatprep.subr.mxu0 0.0
    %458 = vmatpush1.msra.mxu0 0.0
    %459 = vmatprep.subr.mxu0 0.0
    %460 = vmatpush1.msra.mxu0 0.0
    %461 = vmatprep.subr.mxu0 0.0
    %462 = vmatpush1.msra.mxu0 0.0
    %463 = vmatprep.subr.mxu0 0.0
    %464 = vmatpush1.msra.mxu0 0.0
    %465 = vmatprep.subr.mxu0 0.0
    %466 = vmatpush1.msra.mxu0 0.0
    %467 = vmatprep.subr.mxu0 0.0
    %468 = vmatpush1.msra.mxu0 0.0
    %469 = vmatprep.subr.mxu0 0.0
    %470 = vmatpush1.msra.mxu0 0.0
    %471 = vmatprep.subr.mxu0 0.0
    %472 = vmatpush1.msra.mxu0 0.0
    %473 = vmatprep.subr.mxu0 0.0
    %474 = vmatpush1.msra.mxu0 0.0
    %475 = vmatprep.subr.mxu0 0.0
    %476 = vmatpush1.msra.mxu0 0.0
    %477 = vmatprep.subr.mxu0 0.0
    %478 = vmatpush1.msra.mxu0 0.0
    %479 = vmatprep.subr.mxu0 0.0
    %480 = vmatpush1.msra.mxu0 0.0
    %481 = vmatprep.subr.mxu0 0.0
    %482 = vmatpush1.msra.mxu0 0.0
    %483 = vmatprep.subr.mxu0 0.0
    %484 = vmatpush1.msra.mxu0 0.0
    %485 = vmatprep.subr.mxu0 0.0
    %486 = vmatpush1.msra.mxu0 0.0
    %487 = vmatprep.subr.mxu0 0.0
    %488 = vmatpush1.msra.mxu0 0.0
    %489 = vmatprep.subr.mxu0 0.0
    %490 = vmatpush1.msra.mxu0 0.0
    %491 = vmatprep.subr.mxu0 0.0
    %492 = vmatpush1.msra.mxu0 0.0
    %493 = vmatprep.subr.mxu0 0.0
    %494 = vmatpush1.msra.mxu0 0.0
    %495 = vmatprep.subr.mxu0 0.0
    %496 = vmatpush1.msra.mxu0 0.0
    %497 = vmatprep.subr.mxu0 0.0
    %498 = vmatpush1.msra.mxu0 0.0
    %499 = vmatprep.subr.mxu0 0.0
    %500 = vmatpush1.msra.mxu0 0.0
    %501 = vmatprep.subr.mxu0 0.0
    %502 = vmatpush1.msra.mxu0 0.0
    %503 = vmatprep.subr.mxu0 0.0
    %504 = vmatpush1.msra.mxu0 0.0
    %505 = vmatprep.subr.mxu0 0.0
    %506 = vmatpush1.msra.mxu0 0.0
    %507 = vmatprep.subr.mxu0 0.0
    %508 = vmatpush1.msra.mxu0 0.0
    %509 = vmatprep.subr.mxu0 0.0
    %510 = vmatpush1.msra.mxu0 0.0
    %511 = vmatprep.mubr.f32.mxu0 0.0
    %512 = vmatmul.mubr.f32.gmra.mrb[0].mxu0 %v427
    %v513 = vpop.f32.mrb[0].mxu0
    %v514 = vadd.f32 %v409, %v513
    %v515 = vpop.f32.mrb[0].mxu0
    %v516 = vadd.f32 %v413, %v515
    %517 = vmatprep.mubr.f32.mxu0 0.0
    %518 = vmatmul.mubr.f32.gmra.mrb[0].mxu0 %v430
    %v519 = vpop.f32.mrb[0].mxu0
    %v520 = vadd.f32 %v409, %v519
    %v521 = vpop.f32.mrb[0].mxu0
    %v522 = vadd.f32 %v413, %v521
    %523 = vmatprep.mubr.f32.mxu0 0.0
    %524 = vmatmul.mubr.f32.gmra.mrb[0].mxu0 %v433
    %v525 = vpop.f32.mrb[0].mxu0
    %v526 = vadd.f32 %v409, %v525
    %v527 = vpop.f32.mrb[0].mxu0
    %v528 = vadd.f32 %v413, %v527
    %529 = vmatprep.mubr.f32.mxu0 0.0
    %530 = vmatmul.mubr.f32.gmra.mrb[0].mxu0 %v436
    %v531 = vpop.f32.mrb[0].mxu0
    %v532 = vadd.f32 %v409, %v531
    %v533 = vpop.f32.mrb[0].mxu0
    %v534 = vadd.f32 %v413, %v533
    %535 = vmatprep.mubr.f32.mxu0 0.0
    %536 = vmatmul.mubr.f32.gmra.mrb[0].mxu0 %v439
    %v537 = vpop.f32.mrb[0].mxu0
    %v538 = vadd.f32 %v409, %v537
    %v539 = vpop.f32.mrb[0].mxu0
    %v540 = vadd.f32 %v413, %v539
    %541 = vmatprep.mubr.f32.mxu0 0.0
    %542 = vmatmul.mubr.f32.gmra.mrb[0].mxu0 %v442
    %v543 = vpop.f32.mrb[0].mxu0
    %v544 = vadd.f32 %v409, %v543
    %v545 = vpop.f32.mrb[0].mxu0
    %v546 = vadd.f32 %v413, %v545
    %547 = vmatprep.mubr.f32.mxu0 0.0
    %548 = vmatmul.mubr.f32.gmra.mrb[0].mxu0 %v445
    %v549 = vpop.f32.mrb[0].mxu0
    %v550 = vadd.f32 %v409, %v549
    %v551 = vpop.f32.mrb[0].mxu0
    %v552 = vadd.f32 %v413, %v551
    %553 = vmatprep.mubr.f32.mxu0 0.0
    %554 = vmatmul.mubr.f32.gmra.mrb[0].mxu0 %v148
    %v555 = vpop.f32.mrb[0].mxu0
    %v556 = vadd.f32 %v409, %v555
    %v557 = vpop.f32.mrb[0].mxu0
    %v558 = vadd.f32 %v413, %v557
    %559 = vdwg.mxu0
    %560 = vmatprep.subr.mxu0 %v403
    %561 = vmatpush1.msra.mxu0 %v402
    %562 = vmatprep.subr.mxu0 0.0
    %563 = vmatpush1.msra.mxu0 0.0
    %564 = vmatprep.subr.mxu0 0.0
    %565 = vmatpush1.msra.mxu0 0.0
    %566 = vmatprep.subr.mxu0 0.0
    %567 = vmatpush1.msra.mxu0 0.0
    %568 = vmatprep.subr.mxu0 0.0
    %569 = vmatpush1.msra.mxu0 0.0
    %570 = vmatprep.subr.mxu0 0.0
    %571 = vmatpush1.msra.mxu0 0.0
    %572 = vmatprep.subr.mxu0 0.0
    %573 = vmatpush1.msra.mxu0 0.0
    %574 = vmatprep.subr.mxu0 0.0
    %575 = vmatpush1.msra.mxu0 0.0
    %576 = vmatprep.subr.mxu0 0.0
    %577 = vmatpush1.msra.mxu0 0.0
    %578 = vmatprep.subr.mxu0 0.0
    %579 = vmatpush1.msra.mxu0 0.0
    %580 = vmatprep.subr.mxu0 0.0
    %581 = vmatpush1.msra.mxu0 0.0
    %582 = vmatprep.subr.mxu0 0.0
    %583 = vmatpush1.msra.mxu0 0.0
    %584 = vmatprep.subr.mxu0 0.0
    %585 = vmatpush1.msra.mxu0 0.0
    %586 = vmatprep.subr.mxu0 0.0
    %587 = vmatpush1.msra.mxu0 0.0
    %588 = vmatprep.subr.mxu0 0.0
    %589 = vmatpush1.msra.mxu0 0.0
    %590 = vmatprep.subr.mxu0 0.0
    %591 = vmatpush1.msra.mxu0 0.0
    %592 = vmatprep.subr.mxu0 0.0
    %593 = vmatpush1.msra.mxu0 0.0
    %594 = vmatprep.subr.mxu0 0.0
    %595 = vmatpush1.msra.mxu0 0.0
    %596 = vmatprep.subr.mxu0 0.0
    %597 = vmatpush1.msra.mxu0 0.0
    %598 = vmatprep.subr.mxu0 0.0
    %599 = vmatpush1.msra.mxu0 0.0
    %600 = vmatprep.subr.mxu0 0.0
    %601 = vmatpush1.msra.mxu0 0.0
    %602 = vmatprep.subr.mxu0 0.0
    %603 = vmatpush1.msra.mxu0 0.0
    %604 = vmatprep.subr.mxu0 0.0
    %605 = vmatpush1.msra.mxu0 0.0
    %606 = vmatprep.subr.mxu0 0.0
    %607 = vmatpush1.msra.mxu0 0.0
    %608 = vmatprep.subr.mxu0 0.0
    %609 = vmatpush1.msra.mxu0 0.0
    %610 = vmatprep.subr.mxu0 0.0
    %611 = vmatpush1.msra.mxu0 0.0
    %612 = vmatprep.subr.mxu0 0.0
    %613 = vmatpush1.msra.mxu0 0.0
    %614 = vmatprep.subr.mxu0 0.0
    %615 = vmatpush1.msra.mxu0 0.0
    %616 = vmatprep.subr.mxu0 0.0
    %617 = vmatpush1.msra.mxu0 0.0
    %618 = vmatprep.subr.mxu0 0.0
    %619 = vmatpush1.msra.mxu0 0.0
    %620 = vmatprep.subr.mxu0 0.0
    %621 = vmatpush1.msra.mxu0 0.0
    %622 = vmatprep.subr.mxu0 0.0
    %623 = vmatpush1.msra.mxu0 0.0
    %624 = vmatprep.mubr.f32.mxu0 0.0
    %625 = vmatmul.mubr.f32.gmra.mrb[0].mxu0 %v427
    %v626 = vpop.f32.mrb[0].mxu0
    %v627 = vadd.f32 %v417, %v626
    %v628 = vpop.f32.mrb[0].mxu0
    %v629 = vadd.f32 %v421, %v628
    %630 = vmatprep.mubr.f32.mxu0 0.0
    %631 = vmatmul.mubr.f32.gmra.mrb[0].mxu0 %v430
    %v632 = vpop.f32.mrb[0].mxu0
    %v633 = vadd.f32 %v417, %v632
    %v634 = vpop.f32.mrb[0].mxu0
    %v635 = vadd.f32 %v421, %v634
    %636 = vmatprep.mubr.f32.mxu0 0.0
    %637 = vmatmul.mubr.f32.gmra.mrb[0].mxu0 %v433
    %v638 = vpop.f32.mrb[0].mxu0
    %v639 = vadd.f32 %v417, %v638
    %v640 = vpop.f32.mrb[0].mxu0
    %v641 = vadd.f32 %v421, %v640
    %642 = vmatprep.mubr.f32.mxu0 0.0
    %643 = vmatmul.mubr.f32.gmra.mrb[0].mxu0 %v436
    %v644 = vpop.f32.mrb[0].mxu0
    %v645 = vadd.f32 %v417, %v644
    %v646 = vpop.f32.mrb[0].mxu0
    %v647 = vadd.f32 %v421, %v646
    %648 = vmatprep.mubr.f32.mxu0 0.0
    %649 = vmatmul.mubr.f32.gmra.mrb[0].mxu0 %v439
    %v650 = vpop.f32.mrb[0].mxu0
    %v651 = vadd.f32 %v417, %v650
    %v652 = vpop.f32.mrb[0].mxu0
    %v653 = vadd.f32 %v421, %v652
    %654 = vmatprep.mubr.f32.mxu0 0.0
    %655 = vmatmul.mubr.f32.gmra.mrb[0].mxu0 %v442
    %v656 = vpop.f32.mrb[0].mxu0
    %v657 = vadd.f32 %v417, %v656
    %v658 = vpop.f32.mrb[0].mxu0
    %v659 = vadd.f32 %v421, %v658
    %660 = vmatprep.mubr.f32.mxu0 0.0
    %661 = vmatmul.mubr.f32.gmra.mrb[0].mxu0 %v445
    %v662 = vpop.f32.mrb[0].mxu0
    %v663 = vadd.f32 %v417, %v662
    %v664 = vpop.f32.mrb[0].mxu0
    %v665 = vadd.f32 %v421, %v664
    %666 = vmatprep.mubr.f32.mxu0 0.0
    %667 = vmatmul.mubr.f32.gmra.mrb[0].mxu0 %v148
    %v668 = vpop.f32.mrb[0].mxu0
    %v669 = vadd.f32 %v417, %v668
    %v670 = vpop.f32.mrb[0].mxu0
    %v671 = vadd.f32 %v421, %v670
    %672 = vdwg.mxu0
    %v673 = vld [vmem:[#allocation4] sm:$0xff]
    %v674 = vld [vmem:[#allocation4 + $0x8] sm:$0xff]
    %v675 = vld [vmem:[#allocation4 + $0x10] sm:$0xff]
    %v676 = vld [vmem:[#allocation4 + $0x18] sm:$0xff]
    %v677 = vld [vmem:[#allocation4 + $0x20] sm:$0xff]
    %v678 = vld [vmem:[#allocation4 + $0x28] sm:$0xff]
    %v679 = vld [vmem:[#allocation4 + $0x30] sm:$0xff]
    %v680 = vld [vmem:[#allocation4 + $0x38] sm:$0xff]
    %v681 = vld [vmem:[#allocation4 + $0x40] sm:$0xff]
    %v682 = vld [vmem:[#allocation4 + $0x48] sm:$0xff]
    %v683 = vld [vmem:[#allocation4 + $0x50] sm:$0xff]
    %v684 = vld [vmem:[#allocation4 + $0x58] sm:$0xff]
    %v685 = vld [vmem:[#allocation4 + $0x60] sm:$0xff]
    %v686 = vld [vmem:[#allocation4 + $0x68] sm:$0xff]
    %v687 = vld [vmem:[#allocation4 + $0x70] sm:$0xff]
    %v688 = vld [vmem:[#allocation4 + $0x78] sm:$0xff]
    %v689 = vld [vmem:[#allocation4 + $0x80] sm:$0xff]
    %v690 = vld [vmem:[#allocation4 + $0x88] sm:$0xff]
    %v691 = vld [vmem:[#allocation4 + $0x90] sm:$0xff]
    %v692 = vld [vmem:[#allocation4 + $0x98] sm:$0xff]
    %v693 = vld [vmem:[#allocation4 + $0xa0] sm:$0xff]
    %v694 = vld [vmem:[#allocation4 + $0xa8] sm:$0xff]
    %v695 = vld [vmem:[#allocation4 + $0xb0] sm:$0xff]
    %v696 = vld [vmem:[#allocation4 + $0xb8] sm:$0xff]
    %v697 = vld [vmem:[#allocation4 + $0xc0] sm:$0xff]
    %v698 = vld [vmem:[#allocation4 + $0xc8] sm:$0xff]
    %v699 = vld [vmem:[#allocation4 + $0xd0] sm:$0xff]
    %v700 = vld [vmem:[#allocation4 + $0xd8] sm:$0xff]
    %v701 = vld [vmem:[#allocation4 + $0xe0] sm:$0xff]
    %v702 = vld [vmem:[#allocation4 + $0xe8] sm:$0xff]
    %v703 = vld [vmem:[#allocation4 + $0xf0] sm:$0xff]
    %v704 = vld [vmem:[#allocation4 + $0xf8] sm:$0xff]
    %v705 = vld [vmem:[#allocation4 + $0x100] sm:$0xff]
    %v706 = vld [vmem:[#allocation4 + $0x108] sm:$0xff]
    %v707 = vld [vmem:[#allocation4 + $0x110] sm:$0xff]
    %v708 = vld [vmem:[#allocation4 + $0x118] sm:$0xff]
    %v709 = vld [vmem:[#allocation4 + $0x120] sm:$0xff]
    %v710 = vld [vmem:[#allocation4 + $0x128] sm:$0xff]
    %v711 = vld [vmem:[#allocation4 + $0x130] sm:$0xff]
    %v712 = vld [vmem:[#allocation4 + $0x138] sm:$0xff]
    %v713 = vld [vmem:[#allocation4 + $0x140] sm:$0xff]
    %v714 = vld [vmem:[#allocation4 + $0x148] sm:$0xff]
    %v715 = vld [vmem:[#allocation4 + $0x150] sm:$0xff]
    %v716 = vld [vmem:[#allocation4 + $0x158] sm:$0xff]
    %v717 = vld [vmem:[#allocation4 + $0x160] sm:$0xff]
    %v718 = vld [vmem:[#allocation4 + $0x168] sm:$0xff]
    %v719 = vld [vmem:[#allocation4 + $0x170] sm:$0xff]
    %v720 = vld [vmem:[#allocation4 + $0x178] sm:$0xff]
    %v721 = vld [vmem:[#allocation4 + $0x180] sm:$0xff]
    %v722 = vld [vmem:[#allocation4 + $0x188] sm:$0xff]
    %v723 = vld [vmem:[#allocation4 + $0x190] sm:$0xff]
    %v724 = vld [vmem:[#allocation4 + $0x198] sm:$0xff]
    %v725 = vld [vmem:[#allocation4 + $0x1a0] sm:$0xff]
    %v726 = vld [vmem:[#allocation4 + $0x1a8] sm:$0xff]
    %v727 = vld [vmem:[#allocation4 + $0x1b0] sm:$0xff]
    %v728 = vld [vmem:[#allocation4 + $0x1b8] sm:$0xff]
    %v729 = vld [vmem:[#allocation4 + $0x1c0] sm:$0xff]
    %v730 = vld [vmem:[#allocation4 + $0x1c8] sm:$0xff]
    %v731 = vld [vmem:[#allocation4 + $0x1d0] sm:$0xff]
    %v732 = vld [vmem:[#allocation4 + $0x1d8] sm:$0xff]
    %v733 = vld [vmem:[#allocation4 + $0x1e0] sm:$0xff]
    %v734 = vld [vmem:[#allocation4 + $0x1e8] sm:$0xff]
    %v735 = vld [vmem:[#allocation4 + $0x1f0] sm:$0xff]
    %v736 = vld [vmem:[#allocation4 + $0x1f8] sm:$0xff]
    %v737 = vxor.u32 %v514, 2147483648
    %v738 = vmul.f32 %v737, 1.442695
    %v739 = vpow.pop %v738
    %v740 = vadd.f32 %v739, 1.0
    %v741 = vrcp.pop %v740
    %v742 = vmul.f32 1.0, %v741
    %v743 = vxor.u32 %v516, 2147483648
    %v744 = vmul.f32 %v743, 1.442695
    %v745 = vpow.pop %v744
    %v746 = vadd.f32 %v745, 1.0
    %v747 = vrcp.pop %v746
    %v748 = vmul.f32 1.0, %v747
    %v749 = vtanh.pop %v627
    %v750 = vxor.u32 %v629, 2147483648
    %v751 = vmul.f32 %v750, 1.442695
    %v752 = vpow.pop %v751
    %v753 = vadd.f32 %v752, 1.0
    %v754 = vrcp.pop %v753
    %v755 = vmul.f32 1.0, %v754
    %v756 = vmul.f32 %v748, 0.0
    %v757 = vmul.f32 %v742, %v749
    %v758 = vadd.f32 %v756, %v757
    %v759 = vtanh.pop %v758
    %v760 = vmul.f32 %v755, %v759
    %761 = vmatprep.subr.mxu0 %v674
    %762 = vmatpush1.msra.mxu0 %v673
    %763 = vmatprep.subr.mxu0 %v678
    %764 = vmatpush1.msra.mxu0 %v677
    %765 = vmatprep.subr.mxu0 %v682
    %766 = vmatpush1.msra.mxu0 %v681
    %767 = vmatprep.subr.mxu0 %v686
    %768 = vmatpush1.msra.mxu0 %v685
    %769 = vmatprep.subr.mxu0 %v690
    %770 = vmatpush1.msra.mxu0 %v689
    %771 = vmatprep.subr.mxu0 %v694
    %772 = vmatpush1.msra.mxu0 %v693
    %773 = vmatprep.subr.mxu0 %v698
    %774 = vmatpush1.msra.mxu0 %v697
    %775 = vmatprep.subr.mxu0 %v702
    %776 = vmatpush1.msra.mxu0 %v701
    %777 = vmatprep.subr.mxu0 %v706
    %778 = vmatpush1.msra.mxu0 %v705
    %779 = vmatprep.subr.mxu0 %v710
    %780 = vmatpush1.msra.mxu0 %v709
    %781 = vmatprep.subr.mxu0 %v714
    %782 = vmatpush1.msra.mxu0 %v713
    %783 = vmatprep.subr.mxu0 %v718
    %784 = vmatpush1.msra.mxu0 %v717
    %785 = vmatprep.subr.mxu0 %v722
    %786 = vmatpush1.msra.mxu0 %v721
    %787 = vmatprep.subr.mxu0 %v726
    %788 = vmatpush1.msra.mxu0 %v725
    %789 = vmatprep.subr.mxu0 %v730
    %790 = vmatpush1.msra.mxu0 %v729
    %791 = vmatprep.subr.mxu0 %v734
    %792 = vmatpush1.msra.mxu0 %v733
    %793 = vmatprep.subr.mxu0 0.0
    %794 = vmatpush1.msra.mxu0 0.0
    %795 = vmatprep.subr.mxu0 0.0
    %796 = vmatpush1.msra.mxu0 0.0
    %797 = vmatprep.subr.mxu0 0.0
    %798 = vmatpush1.msra.mxu0 0.0
    %799 = vmatprep.subr.mxu0 0.0
    %800 = vmatpush1.msra.mxu0 0.0
    %801 = vmatprep.subr.mxu0 0.0
    %802 = vmatpush1.msra.mxu0 0.0
    %803 = vmatprep.subr.mxu0 0.0
    %804 = vmatpush1.msra.mxu0 0.0
    %805 = vmatprep.subr.mxu0 0.0
    %806 = vmatpush1.msra.mxu0 0.0
    %807 = vmatprep.subr.mxu0 0.0
    %808 = vmatpush1.msra.mxu0 0.0
    %809 = vmatprep.subr.mxu0 0.0
    %810 = vmatpush1.msra.mxu0 0.0
    %811 = vmatprep.subr.mxu0 0.0
    %812 = vmatpush1.msra.mxu0 0.0
    %813 = vmatprep.subr.mxu0 0.0
    %814 = vmatpush1.msra.mxu0 0.0
    %815 = vmatprep.subr.mxu0 0.0
    %816 = vmatpush1.msra.mxu0 0.0
    %817 = vmatprep.subr.mxu0 0.0
    %818 = vmatpush1.msra.mxu0 0.0
    %819 = vmatprep.subr.mxu0 0.0
    %820 = vmatpush1.msra.mxu0 0.0
    %821 = vmatprep.subr.mxu0 0.0
    %822 = vmatpush1.msra.mxu0 0.0
    %823 = vmatprep.subr.mxu0 0.0
    %824 = vmatpush1.msra.mxu0 0.0
    %825 = vmatprep.mubr.f32.mxu0 0.0
    %826 = vmatmul.mubr.f32.gmra.mrb[0].mxu0 %v760
    %v827 = vpop.f32.mrb[0].mxu0
    %v828 = vadd.f32 0.0, %v827
    %v829 = vpop.f32.mrb[0].mxu0
    %v830 = vadd.f32 0.0, %v829
    %831 = vdwg.mxu0
    %832 = vmatprep.subr.mxu0 %v676
    %833 = vmatpush1.msra.mxu0 %v675
    %834 = vmatprep.subr.mxu0 %v680
    %835 = vmatpush1.msra.mxu0 %v679
    %836 = vmatprep.subr.mxu0 %v684
    %837 = vmatpush1.msra.mxu0 %v683
    %838 = vmatprep.subr.mxu0 %v688
    %839 = vmatpush1.msra.mxu0 %v687
    %840 = vmatprep.subr.mxu0 %v692
    %841 = vmatpush1.msra.mxu0 %v691
    %842 = vmatprep.subr.mxu0 %v696
    %843 = vmatpush1.msra.mxu0 %v695
    %844 = vmatprep.subr.mxu0 %v700
    %845 = vmatpush1.msra.mxu0 %v699
    %846 = vmatprep.subr.mxu0 %v704
    %847 = vmatpush1.msra.mxu0 %v703
    %848 = vmatprep.subr.mxu0 %v708
    %849 = vmatpush1.msra.mxu0 %v707
    %850 = vmatprep.subr.mxu0 %v712
    %851 = vmatpush1.msra.mxu0 %v711
    %852 = vmatprep.subr.mxu0 %v716
    %853 = vmatpush1.msra.mxu0 %v715
    %854 = vmatprep.subr.mxu0 %v720
    %855 = vmatpush1.msra.mxu0 %v719
    %856 = vmatprep.subr.mxu0 %v724
    %857 = vmatpush1.msra.mxu0 %v723
    %858 = vmatprep.subr.mxu0 %v728
    %859 = vmatpush1.msra.mxu0 %v727
    %860 = vmatprep.subr.mxu0 %v732
    %861 = vmatpush1.msra.mxu0 %v731
    %862 = vmatprep.subr.mxu0 %v736
    %863 = vmatpush1.msra.mxu0 %v735
    %864 = vmatprep.subr.mxu0 0.0
    %865 = vmatpush1.msra.mxu0 0.0
    %866 = vmatprep.subr.mxu0 0.0
    %867 = vmatpush1.msra.mxu0 0.0
    %868 = vmatprep.subr.mxu0 0.0
    %869 = vmatpush1.msra.mxu0 0.0
    %870 = vmatprep.subr.mxu0 0.0
    %871 = vmatpush1.msra.mxu0 0.0
    %872 = vmatprep.subr.mxu0 0.0
    %873 = vmatpush1.msra.mxu0 0.0
    %874 = vmatprep.subr.mxu0 0.0
    %875 = vmatpush1.msra.mxu0 0.0
    %876 = vmatprep.subr.mxu0 0.0
    %877 = vmatpush1.msra.mxu0 0.0
    %878 = vmatprep.subr.mxu0 0.0
    %879 = vmatpush1.msra.mxu0 0.0
    %880 = vmatprep.subr.mxu0 0.0
    %881 = vmatpush1.msra.mxu0 0.0
    %882 = vmatprep.subr.mxu0 0.0
    %883 = vmatpush1.msra.mxu0 0.0
    %884 = vmatprep.subr.mxu0 0.0
    %885 = vmatpush1.msra.mxu0 0.0
    %886 = vmatprep.subr.mxu0 0.0
    %887 = vmatpush1.msra.mxu0 0.0
    %888 = vmatprep.subr.mxu0 0.0
    %889 = vmatpush1.msra.mxu0 0.0
    %890 = vmatprep.subr.mxu0 0.0
    %891 = vmatpush1.msra.mxu0 0.0
    %892 = vmatprep.subr.mxu0 0.0
    %893 = vmatpush1.msra.mxu0 0.0
    %894 = vmatprep.subr.mxu0 0.0
    %895 = vmatpush1.msra.mxu0 0.0
    %896 = vmatprep.mubr.f32.mxu0 0.0
    %897 = vmatmul.mubr.f32.gmra.mrb[0].mxu0 %v760
    %v898 = vpop.f32.mrb[0].mxu0
    %v899 = vadd.f32 0.0, %v898
    %v900 = vpop.f32.mrb[0].mxu0
    %v901 = vadd.f32 0.0, %v900
    %902 = vdwg.mxu0
    %v903 = vadd.f32 %v520, %v828
    %v904 = vadd.f32 %v522, %v830
    %v905 = vadd.f32 %v633, %v899
    %v906 = vadd.f32 %v635, %v901
    %v907 = vxor.u32 %v903, 2147483648
    %v908 = vmul.f32 %v907, 1.442695
    %v909 = vpow.pop %v908
    %v910 = vadd.f32 %v909, 1.0
    %v911 = vrcp.pop %v910
    %v912 = vmul.f32 1.0, %v911
    %v913 = vxor.u32 %v904, 2147483648
    %v914 = vmul.f32 %v913, 1.442695
    %v915 = vpow.pop %v914
    %v916 = vadd.f32 %v915, 1.0
    %v917 = vrcp.pop %v916
    %v918 = vmul.f32 1.0, %v917
    %v919 = vtanh.pop %v905
    %v920 = vxor.u32 %v906, 2147483648
    %v921 = vmul.f32 %v920, 1.442695
    %v922 = vpow.pop %v921
    %v923 = vadd.f32 %v922, 1.0
    %v924 = vrcp.pop %v923
    %v925 = vmul.f32 1.0, %v924
    %v926 = vmul.f32 %v918, %v758
    %v927 = vmul.f32 %v912, %v919
    %v928 = vadd.f32 %v926, %v927
    %v929 = vtanh.pop %v928
    %v930 = vmul.f32 %v925, %v929
    %931 = vmatprep.subr.mxu0 %v674
    %932 = vmatpush1.msra.mxu0 %v673
    %933 = vmatprep.subr.mxu0 %v678
    %934 = vmatpush1.msra.mxu0 %v677
    %935 = vmatprep.subr.mxu0 %v682
    %936 = vmatpush1.msra.mxu0 %v681
    %937 = vmatprep.subr.mxu0 %v686
    %938 = vmatpush1.msra.mxu0 %v685
    %939 = vmatprep.subr.mxu0 %v690
    %940 = vmatpush1.msra.mxu0 %v689
    %941 = vmatprep.subr.mxu0 %v694
    %942 = vmatpush1.msra.mxu0 %v693
    %943 = vmatprep.subr.mxu0 %v698
    %944 = vmatpush1.msra.mxu0 %v697
    %945 = vmatprep.subr.mxu0 %v702
    %946 = vmatpush1.msra.mxu0 %v701
    %947 = vmatprep.subr.mxu0 %v706
    %948 = vmatpush1.msra.mxu0 %v705
    %949 = vmatprep.subr.mxu0 %v710
    %950 = vmatpush1.msra.mxu0 %v709
    %951 = vmatprep.subr.mxu0 %v714
    %952 = vmatpush1.msra.mxu0 %v713
    %953 = vmatprep.subr.mxu0 %v718
    %954 = vmatpush1.msra.mxu0 %v717
    %955 = vmatprep.subr.mxu0 %v722
    %956 = vmatpush1.msra.mxu0 %v721
    %957 = vmatprep.subr.mxu0 %v726
    %958 = vmatpush1.msra.mxu0 %v725
    %959 = vmatprep.subr.mxu0 %v730
    %960 = vmatpush1.msra.mxu0 %v729
    %961 = vmatprep.subr.mxu0 %v734
    %962 = vmatpush1.msra.mxu0 %v733
    %963 = vmatprep.subr.mxu0 0.0
    %964 = vmatpush1.msra.mxu0 0.0
    %965 = vmatprep.subr.mxu0 0.0
    %966 = vmatpush1.msra.mxu0 0.0
    %967 = vmatprep.subr.mxu0 0.0
    %968 = vmatpush1.msra.mxu0 0.0
    %969 = vmatprep.subr.mxu0 0.0
    %970 = vmatpush1.msra.mxu0 0.0
    %971 = vmatprep.subr.mxu0 0.0
    %972 = vmatpush1.msra.mxu0 0.0
    %973 = vmatprep.subr.mxu0 0.0
    %974 = vmatpush1.msra.mxu0 0.0
    %975 = vmatprep.subr.mxu0 0.0
    %976 = vmatpush1.msra.mxu0 0.0
    %977 = vmatprep.subr.mxu0 0.0
    %978 = vmatpush1.msra.mxu0 0.0
    %979 = vmatprep.subr.mxu0 0.0
    %980 = vmatpush1.msra.mxu0 0.0
    %981 = vmatprep.subr.mxu0 0.0
    %982 = vmatpush1.msra.mxu0 0.0
    %983 = vmatprep.subr.mxu0 0.0
    %984 = vmatpush1.msra.mxu0 0.0
    %985 = vmatprep.subr.mxu0 0.0
    %986 = vmatpush1.msra.mxu0 0.0
    %987 = vmatprep.subr.mxu0 0.0
    %988 = vmatpush1.msra.mxu0 0.0
    %989 = vmatprep.subr.mxu0 0.0
    %990 = vmatpush1.msra.mxu0 0.0
    %991 = vmatprep.subr.mxu0 0.0
    %992 = vmatpush1.msra.mxu0 0.0
    %993 = vmatprep.subr.mxu0 0.0
    %994 = vmatpush1.msra.mxu0 0.0
    %995 = vmatprep.mubr.f32.mxu0 0.0
    %996 = vmatmul.mubr.f32.gmra.mrb[0].mxu0 %v930
    %v997 = vpop.f32.mrb[0].mxu0
    %v998 = vadd.f32 0.0, %v997
    %v999 = vpop.f32.mrb[0].mxu0
    %v1000 = vadd.f32 0.0, %v999
    %1001 = vdwg.mxu0
    %1002 = vmatprep.subr.mxu0 %v676
    %1003 = vmatpush1.msra.mxu0 %v675
    %1004 = vmatprep.subr.mxu0 %v680
    %1005 = vmatpush1.msra.mxu0 %v679
    %1006 = vmatprep.subr.mxu0 %v684
    %1007 = vmatpush1.msra.mxu0 %v683
    %1008 = vmatprep.subr.mxu0 %v688
    %1009 = vmatpush1.msra.mxu0 %v687
    %1010 = vmatprep.subr.mxu0 %v692
    %1011 = vmatpush1.msra.mxu0 %v691
    %1012 = vmatprep.subr.mxu0 %v696
    %1013 = vmatpush1.msra.mxu0 %v695
    %1014 = vmatprep.subr.mxu0 %v700
    %1015 = vmatpush1.msra.mxu0 %v699
    %1016 = vmatprep.subr.mxu0 %v704
    %1017 = vmatpush1.msra.mxu0 %v703
    %1018 = vmatprep.subr.mxu0 %v708
    %1019 = vmatpush1.msra.mxu0 %v707
    %1020 = vmatprep.subr.mxu0 %v712
    %1021 = vmatpush1.msra.mxu0 %v711
    %1022 = vmatprep.subr.mxu0 %v716
    %1023 = vmatpush1.msra.mxu0 %v715
    %1024 = vmatprep.subr.mxu0 %v720
    %1025 = vmatpush1.msra.mxu0 %v719
    %1026 = vmatprep.subr.mxu0 %v724
    %1027 = vmatpush1.msra.mxu0 %v723
    %1028 = vmatprep.subr.mxu0 %v728
    %1029 = vmatpush1.msra.mxu0 %v727
    %1030 = vmatprep.subr.mxu0 %v732
    %1031 = vmatpush1.msra.mxu0 %v731
    %1032 = vmatprep.subr.mxu0 %v736
    %1033 = vmatpush1.msra.mxu0 %v735
    %1034 = vmatprep.subr.mxu0 0.0
    %1035 = vmatpush1.msra.mxu0 0.0
    %1036 = vmatprep.subr.mxu0 0.0
    %1037 = vmatpush1.msra.mxu0 0.0
    %1038 = vmatprep.subr.mxu0 0.0
    %1039 = vmatpush1.msra.mxu0 0.0
    %1040 = vmatprep.subr.mxu0 0.0
    %1041 = vmatpush1.msra.mxu0 0.0
    %1042 = vmatprep.subr.mxu0 0.0
    %1043 = vmatpush1.msra.mxu0 0.0
    %1044 = vmatprep.subr.mxu0 0.0
    %1045 = vmatpush1.msra.mxu0 0.0
    %1046 = vmatprep.subr.mxu0 0.0
    %1047 = vmatpush1.msra.mxu0 0.0
    %1048 = vmatprep.subr.mxu0 0.0
    %1049 = vmatpush1.msra.mxu0 0.0
    %1050 = vmatprep.subr.mxu0 0.0
    %1051 = vmatpush1.msra.mxu0 0.0
    %1052 = vmatprep.subr.mxu0 0.0
    %1053 = vmatpush1.msra.mxu0 0.0
    %1054 = vmatprep.subr.mxu0 0.0
    %1055 = vmatpush1.msra.mxu0 0.0
    %1056 = vmatprep.subr.mxu0 0.0
    %1057 = vmatpush1.msra.mxu0 0.0
    %1058 = vmatprep.subr.mxu0 0.0
    %1059 = vmatpush1.msra.mxu0 0.0
    %1060 = vmatprep.subr.mxu0 0.0
    %1061 = vmatpush1.msra.mxu0 0.0
    %1062 = vmatprep.subr.mxu0 0.0
    %1063 = vmatpush1.msra.mxu0 0.0
    %1064 = vmatprep.subr.mxu0 0.0
    %1065 = vmatpush1.msra.mxu0 0.0
    %1066 = vmatprep.mubr.f32.mxu0 0.0
    %1067 = vmatmul.mubr.f32.gmra.mrb[0].mxu0 %v930
    %v1068 = vpop.f32.mrb[0].mxu0
    %v1069 = vadd.f32 0.0, %v1068
    %v1070 = vpop.f32.mrb[0].mxu0
    %v1071 = vadd.f32 0.0, %v1070
    %1072 = vdwg.mxu0
    %v1073 = vadd.f32 %v526, %v998
    %v1074 = vadd.f32 %v528, %v1000
    %v1075 = vadd.f32 %v639, %v1069
    %v1076 = vadd.f32 %v641, %v1071
    %v1077 = vxor.u32 %v1073, 2147483648
    %v1078 = vmul.f32 %v1077, 1.442695
    %v1079 = vpow.pop %v1078
    %v1080 = vadd.f32 %v1079, 1.0
    %v1081 = vrcp.pop %v1080
    %v1082 = vmul.f32 1.0, %v1081
    %v1083 = vxor.u32 %v1074, 2147483648
    %v1084 = vmul.f32 %v1083, 1.442695
    %v1085 = vpow.pop %v1084
    %v1086 = vadd.f32 %v1085, 1.0
    %v1087 = vrcp.pop %v1086
    %v1088 = vmul.f32 1.0, %v1087
    %v1089 = vtanh.pop %v1075
    %v1090 = vxor.u32 %v1076, 2147483648
    %v1091 = vmul.f32 %v1090, 1.442695
    %v1092 = vpow.pop %v1091
    %v1093 = vadd.f32 %v1092, 1.0
    %v1094 = vrcp.pop %v1093
    %v1095 = vmul.f32 1.0, %v1094
    %v1096 = vmul.f32 %v1088, %v928
    %v1097 = vmul.f32 %v1082, %v1089
    %v1098 = vadd.f32 %v1096, %v1097
    %v1099 = vtanh.pop %v1098
    %v1100 = vmul.f32 %v1095, %v1099
    %1101 = vmatprep.subr.mxu0 %v674
    %1102 = vmatpush1.msra.mxu0 %v673
    %1103 = vmatprep.subr.mxu0 %v678
    %1104 = vmatpush1.msra.mxu0 %v677
    %1105 = vmatprep.subr.mxu0 %v682
    %1106 = vmatpush1.msra.mxu0 %v681
    %1107 = vmatprep.subr.mxu0 %v686
    %1108 = vmatpush1.msra.mxu0 %v685
    %1109 = vmatprep.subr.mxu0 %v690
    %1110 = vmatpush1.msra.mxu0 %v689
    %1111 = vmatprep.subr.mxu0 %v694
    %1112 = vmatpush1.msra.mxu0 %v693
    %1113 = vmatprep.subr.mxu0 %v698
    %1114 = vmatpush1.msra.mxu0 %v697
    %1115 = vmatprep.subr.mxu0 %v702
    %1116 = vmatpush1.msra.mxu0 %v701
    %1117 = vmatprep.subr.mxu0 %v706
    %1118 = vmatpush1.msra.mxu0 %v705
    %1119 = vmatprep.subr.mxu0 %v710
    %1120 = vmatpush1.msra.mxu0 %v709
    %1121 = vmatprep.subr.mxu0 %v714
    %1122 = vmatpush1.msra.mxu0 %v713
    %1123 = vmatprep.subr.mxu0 %v718
    %1124 = vmatpush1.msra.mxu0 %v717
    %1125 = vmatprep.subr.mxu0 %v722
    %1126 = vmatpush1.msra.mxu0 %v721
    %1127 = vmatprep.subr.mxu0 %v726
    %1128 = vmatpush1.msra.mxu0 %v725
    %1129 = vmatprep.subr.mxu0 %v730
    %1130 = vmatpush1.msra.mxu0 %v729
    %1131 = vmatprep.subr.mxu0 %v734
    %1132 = vmatpush1.msra.mxu0 %v733
    %1133 = vmatprep.subr.mxu0 0.0
    %1134 = vmatpush1.msra.mxu0 0.0
    %1135 = vmatprep.subr.mxu0 0.0
    %1136 = vmatpush1.msra.mxu0 0.0
    %1137 = vmatprep.subr.mxu0 0.0
    %1138 = vmatpush1.msra.mxu0 0.0
    %1139 = vmatprep.subr.mxu0 0.0
    %1140 = vmatpush1.msra.mxu0 0.0
    %1141 = vmatprep.subr.mxu0 0.0
    %1142 = vmatpush1.msra.mxu0 0.0
    %1143 = vmatprep.subr.mxu0 0.0
    %1144 = vmatpush1.msra.mxu0 0.0
    %1145 = vmatprep.subr.mxu0 0.0
    %1146 = vmatpush1.msra.mxu0 0.0
    %1147 = vmatprep.subr.mxu0 0.0
    %1148 = vmatpush1.msra.mxu0 0.0
    %1149 = vmatprep.subr.mxu0 0.0
    %1150 = vmatpush1.msra.mxu0 0.0
    %1151 = vmatprep.subr.mxu0 0.0
    %1152 = vmatpush1.msra.mxu0 0.0
    %1153 = vmatprep.subr.mxu0 0.0
    %1154 = vmatpush1.msra.mxu0 0.0
    %1155 = vmatprep.subr.mxu0 0.0
    %1156 = vmatpush1.msra.mxu0 0.0
    %1157 = vmatprep.subr.mxu0 0.0
    %1158 = vmatpush1.msra.mxu0 0.0
    %1159 = vmatprep.subr.mxu0 0.0
    %1160 = vmatpush1.msra.mxu0 0.0
    %1161 = vmatprep.subr.mxu0 0.0
    %1162 = vmatpush1.msra.mxu0 0.0
    %1163 = vmatprep.subr.mxu0 0.0
    %1164 = vmatpush1.msra.mxu0 0.0
    %1165 = vmatprep.mubr.f32.mxu0 0.0
    %1166 = vmatmul.mubr.f32.gmra.mrb[0].mxu0 %v1100
    %v1167 = vpop.f32.mrb[0].mxu0
    %v1168 = vadd.f32 0.0, %v1167
    %v1169 = vpop.f32.mrb[0].mxu0
    %v1170 = vadd.f32 0.0, %v1169
    %1171 = vdwg.mxu0
    %1172 = vmatprep.subr.mxu0 %v676
    %1173 = vmatpush1.msra.mxu0 %v675
    %1174 = vmatprep.subr.mxu0 %v680
    %1175 = vmatpush1.msra.mxu0 %v679
    %1176 = vmatprep.subr.mxu0 %v684
    %1177 = vmatpush1.msra.mxu0 %v683
    %1178 = vmatprep.subr.mxu0 %v688
    %1179 = vmatpush1.msra.mxu0 %v687
    %1180 = vmatprep.subr.mxu0 %v692
    %1181 = vmatpush1.msra.mxu0 %v691
    %1182 = vmatprep.subr.mxu0 %v696
    %1183 = vmatpush1.msra.mxu0 %v695
    %1184 = vmatprep.subr.mxu0 %v700
    %1185 = vmatpush1.msra.mxu0 %v699
    %1186 = vmatprep.subr.mxu0 %v704
    %1187 = vmatpush1.msra.mxu0 %v703
    %1188 = vmatprep.subr.mxu0 %v708
    %1189 = vmatpush1.msra.mxu0 %v707
    %1190 = vmatprep.subr.mxu0 %v712
    %1191 = vmatpush1.msra.mxu0 %v711
    %1192 = vmatprep.subr.mxu0 %v716
    %1193 = vmatpush1.msra.mxu0 %v715
    %1194 = vmatprep.subr.mxu0 %v720
    %1195 = vmatpush1.msra.mxu0 %v719
    %1196 = vmatprep.subr.mxu0 %v724
    %1197 = vmatpush1.msra.mxu0 %v723
    %1198 = vmatprep.subr.mxu0 %v728
    %1199 = vmatpush1.msra.mxu0 %v727
    %1200 = vmatprep.subr.mxu0 %v732
    %1201 = vmatpush1.msra.mxu0 %v731
    %1202 = vmatprep.subr.mxu0 %v736
    %1203 = vmatpush1.msra.mxu0 %v735
    %1204 = vmatprep.subr.mxu0 0.0
    %1205 = vmatpush1.msra.mxu0 0.0
    %1206 = vmatprep.subr.mxu0 0.0
    %1207 = vmatpush1.msra.mxu0 0.0
    %1208 = vmatprep.subr.mxu0 0.0
    %1209 = vmatpush1.msra.mxu0 0.0
    %1210 = vmatprep.subr.mxu0 0.0
    %1211 = vmatpush1.msra.mxu0 0.0
    %1212 = vmatprep.subr.mxu0 0.0
    %1213 = vmatpush1.msra.mxu0 0.0
    %1214 = vmatprep.subr.mxu0 0.0
    %1215 = vmatpush1.msra.mxu0 0.0
    %1216 = vmatprep.subr.mxu0 0.0
    %1217 = vmatpush1.msra.mxu0 0.0
    %1218 = vmatprep.subr.mxu0 0.0
    %1219 = vmatpush1.msra.mxu0 0.0
    %1220 = vmatprep.subr.mxu0 0.0
    %1221 = vmatpush1.msra.mxu0 0.0
    %1222 = vmatprep.subr.mxu0 0.0
    %1223 = vmatpush1.msra.mxu0 0.0
    %1224 = vmatprep.subr.mxu0 0.0
    %1225 = vmatpush1.msra.mxu0 0.0
    %1226 = vmatprep.subr.mxu0 0.0
    %1227 = vmatpush1.msra.mxu0 0.0
    %1228 = vmatprep.subr.mxu0 0.0
    %1229 = vmatpush1.msra.mxu0 0.0
    %1230 = vmatprep.subr.mxu0 0.0
    %1231 = vmatpush1.msra.mxu0 0.0
    %1232 = vmatprep.subr.mxu0 0.0
    %1233 = vmatpush1.msra.mxu0 0.0
    %1234 = vmatprep.subr.mxu0 0.0
    %1235 = vmatpush1.msra.mxu0 0.0
    %1236 = vmatprep.mubr.f32.mxu0 0.0
    %1237 = vmatmul.mubr.f32.gmra.mrb[0].mxu0 %v1100
    %v1238 = vpop.f32.mrb[0].mxu0
    %v1239 = vadd.f32 0.0, %v1238
    %v1240 = vpop.f32.mrb[0].mxu0
    %v1241 = vadd.f32 0.0, %v1240
    %1242 = vdwg.mxu0
    %v1243 = vadd.f32 %v532, %v1168
    %v1244 = vadd.f32 %v534, %v1170
    %v1245 = vadd.f32 %v645, %v1239
    %v1246 = vadd.f32 %v647, %v1241
    %v1247 = vxor.u32 %v1243, 2147483648
    %v1248 = vmul.f32 %v1247, 1.442695
    %v1249 = vpow.pop %v1248
    %v1250 = vadd.f32 %v1249, 1.0
    %v1251 = vrcp.pop %v1250
    %v1252 = vmul.f32 1.0, %v1251
    %v1253 = vxor.u32 %v1244, 2147483648
    %v1254 = vmul.f32 %v1253, 1.442695
    %v1255 = vpow.pop %v1254
    %v1256 = vadd.f32 %v1255, 1.0
    %v1257 = vrcp.pop %v1256
    %v1258 = vmul.f32 1.0, %v1257
    %v1259 = vtanh.pop %v1245
    %v1260 = vxor.u32 %v1246, 2147483648
    %v1261 = vmul.f32 %v1260, 1.442695
    %v1262 = vpow.pop %v1261
    %v1263 = vadd.f32 %v1262, 1.0
    %v1264 = vrcp.pop %v1263
    %v1265 = vmul.f32 1.0, %v1264
    %v1266 = vmul.f32 %v1258, %v1098
    %v1267 = vmul.f32 %v1252, %v1259
    %v1268 = vadd.f32 %v1266, %v1267
    %v1269 = vtanh.pop %v1268
    %v1270 = vmul.f32 %v1265, %v1269
    %1271 = vmatprep.subr.mxu0 %v674
    %1272 = vmatpush1.msra.mxu0 %v673
    %1273 = vmatprep.subr.mxu0 %v678
    %1274 = vmatpush1.msra.mxu0 %v677
    %1275 = vmatprep.subr.mxu0 %v682
    %1276 = vmatpush1.msra.mxu0 %v681
    %1277 = vmatprep.subr.mxu0 %v686
    %1278 = vmatpush1.msra.mxu0 %v685
    %1279 = vmatprep.subr.mxu0 %v690
    %1280 = vmatpush1.msra.mxu0 %v689
    %1281 = vmatprep.subr.mxu0 %v694
    %1282 = vmatpush1.msra.mxu0 %v693
    %1283 = vmatprep.subr.mxu0 %v698
    %1284 = vmatpush1.msra.mxu0 %v697
    %1285 = vmatprep.subr.mxu0 %v702
    %1286 = vmatpush1.msra.mxu0 %v701
    %1287 = vmatprep.subr.mxu0 %v706
    %1288 = vmatpush1.msra.mxu0 %v705
    %1289 = vmatprep.subr.mxu0 %v710
    %1290 = vmatpush1.msra.mxu0 %v709
    %1291 = vmatprep.subr.mxu0 %v714
    %1292 = vmatpush1.msra.mxu0 %v713
    %1293 = vmatprep.subr.mxu0 %v718
    %1294 = vmatpush1.msra.mxu0 %v717
    %1295 = vmatprep.subr.mxu0 %v722
    %1296 = vmatpush1.msra.mxu0 %v721
    %1297 = vmatprep.subr.mxu0 %v726
    %1298 = vmatpush1.msra.mxu0 %v725
    %1299 = vmatprep.subr.mxu0 %v730
    %1300 = vmatpush1.msra.mxu0 %v729
    %1301 = vmatprep.subr.mxu0 %v734
    %1302 = vmatpush1.msra.mxu0 %v733
    %1303 = vmatprep.subr.mxu0 0.0
    %1304 = vmatpush1.msra.mxu0 0.0
    %1305 = vmatprep.subr.mxu0 0.0
    %1306 = vmatpush1.msra.mxu0 0.0
    %1307 = vmatprep.subr.mxu0 0.0
    %1308 = vmatpush1.msra.mxu0 0.0
    %1309 = vmatprep.subr.mxu0 0.0
    %1310 = vmatpush1.msra.mxu0 0.0
    %1311 = vmatprep.subr.mxu0 0.0
    %1312 = vmatpush1.msra.mxu0 0.0
    %1313 = vmatprep.subr.mxu0 0.0
    %1314 = vmatpush1.msra.mxu0 0.0
    %1315 = vmatprep.subr.mxu0 0.0
    %1316 = vmatpush1.msra.mxu0 0.0
    %1317 = vmatprep.subr.mxu0 0.0
    %1318 = vmatpush1.msra.mxu0 0.0
    %1319 = vmatprep.subr.mxu0 0.0
    %1320 = vmatpush1.msra.mxu0 0.0
    %1321 = vmatprep.subr.mxu0 0.0
    %1322 = vmatpush1.msra.mxu0 0.0
    %1323 = vmatprep.subr.mxu0 0.0
    %1324 = vmatpush1.msra.mxu0 0.0
    %1325 = vmatprep.subr.mxu0 0.0
    %1326 = vmatpush1.msra.mxu0 0.0
    %1327 = vmatprep.subr.mxu0 0.0
    %1328 = vmatpush1.msra.mxu0 0.0
    %1329 = vmatprep.subr.mxu0 0.0
    %1330 = vmatpush1.msra.mxu0 0.0
    %1331 = vmatprep.subr.mxu0 0.0
    %1332 = vmatpush1.msra.mxu0 0.0
    %1333 = vmatprep.subr.mxu0 0.0
    %1334 = vmatpush1.msra.mxu0 0.0
    %1335 = vmatprep.mubr.f32.mxu0 0.0
    %1336 = vmatmul.mubr.f32.gmra.mrb[0].mxu0 %v1270
    %v1337 = vpop.f32.mrb[0].mxu0
    %v1338 = vadd.f32 0.0, %v1337
    %v1339 = vpop.f32.mrb[0].mxu0
    %v1340 = vadd.f32 0.0, %v1339
    %1341 = vdwg.mxu0
    %1342 = vmatprep.subr.mxu0 %v676
    %1343 = vmatpush1.msra.mxu0 %v675
    %1344 = vmatprep.subr.mxu0 %v680
    %1345 = vmatpush1.msra.mxu0 %v679
    %1346 = vmatprep.subr.mxu0 %v684
    %1347 = vmatpush1.msra.mxu0 %v683
    %1348 = vmatprep.subr.mxu0 %v688
    %1349 = vmatpush1.msra.mxu0 %v687
    %1350 = vmatprep.subr.mxu0 %v692
    %1351 = vmatpush1.msra.mxu0 %v691
    %1352 = vmatprep.subr.mxu0 %v696
    %1353 = vmatpush1.msra.mxu0 %v695
    %1354 = vmatprep.subr.mxu0 %v700
    %1355 = vmatpush1.msra.mxu0 %v699
    %1356 = vmatprep.subr.mxu0 %v704
    %1357 = vmatpush1.msra.mxu0 %v703
    %1358 = vmatprep.subr.mxu0 %v708
    %1359 = vmatpush1.msra.mxu0 %v707
    %1360 = vmatprep.subr.mxu0 %v712
    %1361 = vmatpush1.msra.mxu0 %v711
    %1362 = vmatprep.subr.mxu0 %v716
    %1363 = vmatpush1.msra.mxu0 %v715
    %1364 = vmatprep.subr.mxu0 %v720
    %1365 = vmatpush1.msra.mxu0 %v719
    %1366 = vmatprep.subr.mxu0 %v724
    %1367 = vmatpush1.msra.mxu0 %v723
    %1368 = vmatprep.subr.mxu0 %v728
    %1369 = vmatpush1.msra.mxu0 %v727
    %1370 = vmatprep.subr.mxu0 %v732
    %1371 = vmatpush1.msra.mxu0 %v731
    %1372 = vmatprep.subr.mxu0 %v736
    %1373 = vmatpush1.msra.mxu0 %v735
    %1374 = vmatprep.subr.mxu0 0.0
    %1375 = vmatpush1.msra.mxu0 0.0
    %1376 = vmatprep.subr.mxu0 0.0
    %1377 = vmatpush1.msra.mxu0 0.0
    %1378 = vmatprep.subr.mxu0 0.0
    %1379 = vmatpush1.msra.mxu0 0.0
    %1380 = vmatprep.subr.mxu0 0.0
    %1381 = vmatpush1.msra.mxu0 0.0
    %1382 = vmatprep.subr.mxu0 0.0
    %1383 = vmatpush1.msra.mxu0 0.0
    %1384 = vmatprep.subr.mxu0 0.0
    %1385 = vmatpush1.msra.mxu0 0.0
    %1386 = vmatprep.subr.mxu0 0.0
    %1387 = vmatpush1.msra.mxu0 0.0
    %1388 = vmatprep.subr.mxu0 0.0
    %1389 = vmatpush1.msra.mxu0 0.0
    %1390 = vmatprep.subr.mxu0 0.0
    %1391 = vmatpush1.msra.mxu0 0.0
    %1392 = vmatprep.subr.mxu0 0.0
    %1393 = vmatpush1.msra.mxu0 0.0
    %1394 = vmatprep.subr.mxu0 0.0
    %1395 = vmatpush1.msra.mxu0 0.0
    %1396 = vmatprep.subr.mxu0 0.0
    %1397 = vmatpush1.msra.mxu0 0.0
    %1398 = vmatprep.subr.mxu0 0.0
    %1399 = vmatpush1.msra.mxu0 0.0
    %1400 = vmatprep.subr.mxu0 0.0
    %1401 = vmatpush1.msra.mxu0 0.0
    %1402 = vmatprep.subr.mxu0 0.0
    %1403 = vmatpush1.msra.mxu0 0.0
    %1404 = vmatprep.subr.mxu0 0.0
    %1405 = vmatpush1.msra.mxu0 0.0
    %1406 = vmatprep.mubr.f32.mxu0 0.0
    %1407 = vmatmul.mubr.f32.gmra.mrb[0].mxu0 %v1270
    %v1408 = vpop.f32.mrb[0].mxu0
    %v1409 = vadd.f32 0.0, %v1408
    %v1410 = vpop.f32.mrb[0].mxu0
    %v1411 = vadd.f32 0.0, %v1410
    %1412 = vdwg.mxu0
    %v1413 = vadd.f32 %v538, %v1338
    %v1414 = vadd.f32 %v540, %v1340
    %v1415 = vadd.f32 %v651, %v1409
    %v1416 = vadd.f32 %v653, %v1411
    %v1417 = vxor.u32 %v1413, 2147483648
    %v1418 = vmul.f32 %v1417, 1.442695
    %v1419 = vpow.pop %v1418
    %v1420 = vadd.f32 %v1419, 1.0
    %v1421 = vrcp.pop %v1420
    %v1422 = vmul.f32 1.0, %v1421
    %v1423 = vxor.u32 %v1414, 2147483648
    %v1424 = vmul.f32 %v1423, 1.442695
    %v1425 = vpow.pop %v1424
    %v1426 = vadd.f32 %v1425, 1.0
    %v1427 = vrcp.pop %v1426
    %v1428 = vmul.f32 1.0, %v1427
    %v1429 = vtanh.pop %v1415
    %v1430 = vxor.u32 %v1416, 2147483648
    %v1431 = vmul.f32 %v1430, 1.442695
    %v1432 = vpow.pop %v1431
    %v1433 = vadd.f32 %v1432, 1.0
    %v1434 = vrcp.pop %v1433
    %v1435 = vmul.f32 1.0, %v1434
    %v1436 = vmul.f32 %v1428, %v1268
    %v1437 = vmul.f32 %v1422, %v1429
    %v1438 = vadd.f32 %v1436, %v1437
    %v1439 = vtanh.pop %v1438
    %v1440 = vmul.f32 %v1435, %v1439
    %1441 = vmatprep.subr.mxu0 %v674
    %1442 = vmatpush1.msra.mxu0 %v673
    %1443 = vmatprep.subr.mxu0 %v678
    %1444 = vmatpush1.msra.mxu0 %v677
    %1445 = vmatprep.subr.mxu0 %v682
    %1446 = vmatpush1.msra.mxu0 %v681
    %1447 = vmatprep.subr.mxu0 %v686
    %1448 = vmatpush1.msra.mxu0 %v685
    %1449 = vmatprep.subr.mxu0 %v690
    %1450 = vmatpush1.msra.mxu0 %v689
    %1451 = vmatprep.subr.mxu0 %v694
    %1452 = vmatpush1.msra.mxu0 %v693
    %1453 = vmatprep.subr.mxu0 %v698
    %1454 = vmatpush1.msra.mxu0 %v697
    %1455 = vmatprep.subr.mxu0 %v702
    %1456 = vmatpush1.msra.mxu0 %v701
    %1457 = vmatprep.subr.mxu0 %v706
    %1458 = vmatpush1.msra.mxu0 %v705
    %1459 = vmatprep.subr.mxu0 %v710
    %1460 = vmatpush1.msra.mxu0 %v709
    %1461 = vmatprep.subr.mxu0 %v714
    %1462 = vmatpush1.msra.mxu0 %v713
    %1463 = vmatprep.subr.mxu0 %v718
    %1464 = vmatpush1.msra.mxu0 %v717
    %1465 = vmatprep.subr.mxu0 %v722
    %1466 = vmatpush1.msra.mxu0 %v721
    %1467 = vmatprep.subr.mxu0 %v726
    %1468 = vmatpush1.msra.mxu0 %v725
    %1469 = vmatprep.subr.mxu0 %v730
    %1470 = vmatpush1.msra.mxu0 %v729
    %1471 = vmatprep.subr.mxu0 %v734
    %1472 = vmatpush1.msra.mxu0 %v733
    %1473 = vmatprep.subr.mxu0 0.0
    %1474 = vmatpush1.msra.mxu0 0.0
    %1475 = vmatprep.subr.mxu0 0.0
    %1476 = vmatpush1.msra.mxu0 0.0
    %1477 = vmatprep.subr.mxu0 0.0
    %1478 = vmatpush1.msra.mxu0 0.0
    %1479 = vmatprep.subr.mxu0 0.0
    %1480 = vmatpush1.msra.mxu0 0.0
    %1481 = vmatprep.subr.mxu0 0.0
    %1482 = vmatpush1.msra.mxu0 0.0
    %1483 = vmatprep.subr.mxu0 0.0
    %1484 = vmatpush1.msra.mxu0 0.0
    %1485 = vmatprep.subr.mxu0 0.0
    %1486 = vmatpush1.msra.mxu0 0.0
    %1487 = vmatprep.subr.mxu0 0.0
    %1488 = vmatpush1.msra.mxu0 0.0
    %1489 = vmatprep.subr.mxu0 0.0
    %1490 = vmatpush1.msra.mxu0 0.0
    %1491 = vmatprep.subr.mxu0 0.0
    %1492 = vmatpush1.msra.mxu0 0.0
    %1493 = vmatprep.subr.mxu0 0.0
    %1494 = vmatpush1.msra.mxu0 0.0
    %1495 = vmatprep.subr.mxu0 0.0
    %1496 = vmatpush1.msra.mxu0 0.0
    %1497 = vmatprep.subr.mxu0 0.0
    %1498 = vmatpush1.msra.mxu0 0.0
    %1499 = vmatprep.subr.mxu0 0.0
    %1500 = vmatpush1.msra.mxu0 0.0
    %1501 = vmatprep.subr.mxu0 0.0
    %1502 = vmatpush1.msra.mxu0 0.0
    %1503 = vmatprep.subr.mxu0 0.0
    %1504 = vmatpush1.msra.mxu0 0.0
    %1505 = vmatprep.mubr.f32.mxu0 0.0
    %1506 = vmatmul.mubr.f32.gmra.mrb[0].mxu0 %v1440
    %v1507 = vpop.f32.mrb[0].mxu0
    %v1508 = vadd.f32 0.0, %v1507
    %v1509 = vpop.f32.mrb[0].mxu0
    %v1510 = vadd.f32 0.0, %v1509
    %1511 = vdwg.mxu0
    %1512 = vmatprep.subr.mxu0 %v676
    %1513 = vmatpush1.msra.mxu0 %v675
    %1514 = vmatprep.subr.mxu0 %v680
    %1515 = vmatpush1.msra.mxu0 %v679
    %1516 = vmatprep.subr.mxu0 %v684
    %1517 = vmatpush1.msra.mxu0 %v683
    %1518 = vmatprep.subr.mxu0 %v688
    %1519 = vmatpush1.msra.mxu0 %v687
    %1520 = vmatprep.subr.mxu0 %v692
    %1521 = vmatpush1.msra.mxu0 %v691
    %1522 = vmatprep.subr.mxu0 %v696
    %1523 = vmatpush1.msra.mxu0 %v695
    %1524 = vmatprep.subr.mxu0 %v700
    %1525 = vmatpush1.msra.mxu0 %v699
    %1526 = vmatprep.subr.mxu0 %v704
    %1527 = vmatpush1.msra.mxu0 %v703
    %1528 = vmatprep.subr.mxu0 %v708
    %1529 = vmatpush1.msra.mxu0 %v707
    %1530 = vmatprep.subr.mxu0 %v712
    %1531 = vmatpush1.msra.mxu0 %v711
    %1532 = vmatprep.subr.mxu0 %v716
    %1533 = vmatpush1.msra.mxu0 %v715
    %1534 = vmatprep.subr.mxu0 %v720
    %1535 = vmatpush1.msra.mxu0 %v719
    %1536 = vmatprep.subr.mxu0 %v724
    %1537 = vmatpush1.msra.mxu0 %v723
    %1538 = vmatprep.subr.mxu0 %v728
    %1539 = vmatpush1.msra.mxu0 %v727
    %1540 = vmatprep.subr.mxu0 %v732
    %1541 = vmatpush1.msra.mxu0 %v731
    %1542 = vmatprep.subr.mxu0 %v736
    %1543 = vmatpush1.msra.mxu0 %v735
    %1544 = vmatprep.subr.mxu0 0.0
    %1545 = vmatpush1.msra.mxu0 0.0
    %1546 = vmatprep.subr.mxu0 0.0
    %1547 = vmatpush1.msra.mxu0 0.0
    %1548 = vmatprep.subr.mxu0 0.0
    %1549 = vmatpush1.msra.mxu0 0.0
    %1550 = vmatprep.subr.mxu0 0.0
    %1551 = vmatpush1.msra.mxu0 0.0
    %1552 = vmatprep.subr.mxu0 0.0
    %1553 = vmatpush1.msra.mxu0 0.0
    %1554 = vmatprep.subr.mxu0 0.0
    %1555 = vmatpush1.msra.mxu0 0.0
    %1556 = vmatprep.subr.mxu0 0.0
    %1557 = vmatpush1.msra.mxu0 0.0
    %1558 = vmatprep.subr.mxu0 0.0
    %1559 = vmatpush1.msra.mxu0 0.0
    %1560 = vmatprep.subr.mxu0 0.0
    %1561 = vmatpush1.msra.mxu0 0.0
    %1562 = vmatprep.subr.mxu0 0.0
    %1563 = vmatpush1.msra.mxu0 0.0
    %1564 = vmatprep.subr.mxu0 0.0
    %1565 = vmatpush1.msra.mxu0 0.0
    %1566 = vmatprep.subr.mxu0 0.0
    %1567 = vmatpush1.msra.mxu0 0.0
    %1568 = vmatprep.subr.mxu0 0.0
    %1569 = vmatpush1.msra.mxu0 0.0
    %1570 = vmatprep.subr.mxu0 0.0
    %1571 = vmatpush1.msra.mxu0 0.0
    %1572 = vmatprep.subr.mxu0 0.0
    %1573 = vmatpush1.msra.mxu0 0.0
    %1574 = vmatprep.subr.mxu0 0.0
    %1575 = vmatpush1.msra.mxu0 0.0
    %1576 = vmatprep.mubr.f32.mxu0 0.0
    %1577 = vmatmul.mubr.f32.gmra.mrb[0].mxu0 %v1440
    %v1578 = vpop.f32.mrb[0].mxu0
    %v1579 = vadd.f32 0.0, %v1578
    %v1580 = vpop.f32.mrb[0].mxu0
    %v1581 = vadd.f32 0.0, %v1580
    %1582 = vdwg.mxu0
    %v1583 = vadd.f32 %v544, %v1508
    %v1584 = vadd.f32 %v546, %v1510
    %v1585 = vadd.f32 %v657, %v1579
    %v1586 = vadd.f32 %v659, %v1581
    %v1587 = vxor.u32 %v1583, 2147483648
    %v1588 = vmul.f32 %v1587, 1.442695
    %v1589 = vpow.pop %v1588
    %v1590 = vadd.f32 %v1589, 1.0
    %v1591 = vrcp.pop %v1590
    %v1592 = vmul.f32 1.0, %v1591
    %v1593 = vxor.u32 %v1584, 2147483648
    %v1594 = vmul.f32 %v1593, 1.442695
    %v1595 = vpow.pop %v1594
    %v1596 = vadd.f32 %v1595, 1.0
    %v1597 = vrcp.pop %v1596
    %v1598 = vmul.f32 1.0, %v1597
    %v1599 = vtanh.pop %v1585
    %v1600 = vxor.u32 %v1586, 2147483648
    %v1601 = vmul.f32 %v1600, 1.442695
    %v1602 = vpow.pop %v1601
    %v1603 = vadd.f32 %v1602, 1.0
    %v1604 = vrcp.pop %v1603
    %v1605 = vmul.f32 1.0, %v1604
    %v1606 = vmul.f32 %v1598, %v1438
    %v1607 = vmul.f32 %v1592, %v1599
    %v1608 = vadd.f32 %v1606, %v1607
    %v1609 = vtanh.pop %v1608
    %v1610 = vmul.f32 %v1605, %v1609
    %1611 = vmatprep.subr.mxu0 %v674
    %1612 = vmatpush1.msra.mxu0 %v673
    %1613 = vmatprep.subr.mxu0 %v678
    %1614 = vmatpush1.msra.mxu0 %v677
    %1615 = vmatprep.subr.mxu0 %v682
    %1616 = vmatpush1.msra.mxu0 %v681
    %1617 = vmatprep.subr.mxu0 %v686
    %1618 = vmatpush1.msra.mxu0 %v685
    %1619 = vmatprep.subr.mxu0 %v690
    %1620 = vmatpush1.msra.mxu0 %v689
    %1621 = vmatprep.subr.mxu0 %v694
    %1622 = vmatpush1.msra.mxu0 %v693
    %1623 = vmatprep.subr.mxu0 %v698
    %1624 = vmatpush1.msra.mxu0 %v697
    %1625 = vmatprep.subr.mxu0 %v702
    %1626 = vmatpush1.msra.mxu0 %v701
    %1627 = vmatprep.subr.mxu0 %v706
    %1628 = vmatpush1.msra.mxu0 %v705
    %1629 = vmatprep.subr.mxu0 %v710
    %1630 = vmatpush1.msra.mxu0 %v709
    %1631 = vmatprep.subr.mxu0 %v714
    %1632 = vmatpush1.msra.mxu0 %v713
    %1633 = vmatprep.subr.mxu0 %v718
    %1634 = vmatpush1.msra.mxu0 %v717
    %1635 = vmatprep.subr.mxu0 %v722
    %1636 = vmatpush1.msra.mxu0 %v721
    %1637 = vmatprep.subr.mxu0 %v726
    %1638 = vmatpush1.msra.mxu0 %v725
    %1639 = vmatprep.subr.mxu0 %v730
    %1640 = vmatpush1.msra.mxu0 %v729
    %1641 = vmatprep.subr.mxu0 %v734
    %1642 = vmatpush1.msra.mxu0 %v733
    %1643 = vmatprep.subr.mxu0 0.0
    %1644 = vmatpush1.msra.mxu0 0.0
    %1645 = vmatprep.subr.mxu0 0.0
    %1646 = vmatpush1.msra.mxu0 0.0
    %1647 = vmatprep.subr.mxu0 0.0
    %1648 = vmatpush1.msra.mxu0 0.0
    %1649 = vmatprep.subr.mxu0 0.0
    %1650 = vmatpush1.msra.mxu0 0.0
    %1651 = vmatprep.subr.mxu0 0.0
    %1652 = vmatpush1.msra.mxu0 0.0
    %1653 = vmatprep.subr.mxu0 0.0
    %1654 = vmatpush1.msra.mxu0 0.0
    %1655 = vmatprep.subr.mxu0 0.0
    %1656 = vmatpush1.msra.mxu0 0.0
    %1657 = vmatprep.subr.mxu0 0.0
    %1658 = vmatpush1.msra.mxu0 0.0
    %1659 = vmatprep.subr.mxu0 0.0
    %1660 = vmatpush1.msra.mxu0 0.0
    %1661 = vmatprep.subr.mxu0 0.0
    %1662 = vmatpush1.msra.mxu0 0.0
    %1663 = vmatprep.subr.mxu0 0.0
    %1664 = vmatpush1.msra.mxu0 0.0
    %1665 = vmatprep.subr.mxu0 0.0
    %1666 = vmatpush1.msra.mxu0 0.0
    %1667 = vmatprep.subr.mxu0 0.0
    %1668 = vmatpush1.msra.mxu0 0.0
    %1669 = vmatprep.subr.mxu0 0.0
    %1670 = vmatpush1.msra.mxu0 0.0
    %1671 = vmatprep.subr.mxu0 0.0
    %1672 = vmatpush1.msra.mxu0 0.0
    %1673 = vmatprep.subr.mxu0 0.0
    %1674 = vmatpush1.msra.mxu0 0.0
    %1675 = vmatprep.mubr.f32.mxu0 0.0
    %1676 = vmatmul.mubr.f32.gmra.mrb[0].mxu0 %v1610
    %v1677 = vpop.f32.mrb[0].mxu0
    %v1678 = vadd.f32 0.0, %v1677
    %v1679 = vpop.f32.mrb[0].mxu0
    %v1680 = vadd.f32 0.0, %v1679
    %1681 = vdwg.mxu0
    %1682 = vmatprep.subr.mxu0 %v676
    %1683 = vmatpush1.msra.mxu0 %v675
    %1684 = vmatprep.subr.mxu0 %v680
    %1685 = vmatpush1.msra.mxu0 %v679
    %1686 = vmatprep.subr.mxu0 %v684
    %1687 = vmatpush1.msra.mxu0 %v683
    %1688 = vmatprep.subr.mxu0 %v688
    %1689 = vmatpush1.msra.mxu0 %v687
    %1690 = vmatprep.subr.mxu0 %v692
    %1691 = vmatpush1.msra.mxu0 %v691
    %1692 = vmatprep.subr.mxu0 %v696
    %1693 = vmatpush1.msra.mxu0 %v695
    %1694 = vmatprep.subr.mxu0 %v700
    %1695 = vmatpush1.msra.mxu0 %v699
    %1696 = vmatprep.subr.mxu0 %v704
    %1697 = vmatpush1.msra.mxu0 %v703
    %1698 = vmatprep.subr.mxu0 %v708
    %1699 = vmatpush1.msra.mxu0 %v707
    %1700 = vmatprep.subr.mxu0 %v712
    %1701 = vmatpush1.msra.mxu0 %v711
    %1702 = vmatprep.subr.mxu0 %v716
    %1703 = vmatpush1.msra.mxu0 %v715
    %1704 = vmatprep.subr.mxu0 %v720
    %1705 = vmatpush1.msra.mxu0 %v719
    %1706 = vmatprep.subr.mxu0 %v724
    %1707 = vmatpush1.msra.mxu0 %v723
    %1708 = vmatprep.subr.mxu0 %v728
    %1709 = vmatpush1.msra.mxu0 %v727
    %1710 = vmatprep.subr.mxu0 %v732
    %1711 = vmatpush1.msra.mxu0 %v731
    %1712 = vmatprep.subr.mxu0 %v736
    %1713 = vmatpush1.msra.mxu0 %v735
    %1714 = vmatprep.subr.mxu0 0.0
    %1715 = vmatpush1.msra.mxu0 0.0
    %1716 = vmatprep.subr.mxu0 0.0
    %1717 = vmatpush1.msra.mxu0 0.0
    %1718 = vmatprep.subr.mxu0 0.0
    %1719 = vmatpush1.msra.mxu0 0.0
    %1720 = vmatprep.subr.mxu0 0.0
    %1721 = vmatpush1.msra.mxu0 0.0
    %1722 = vmatprep.subr.mxu0 0.0
    %1723 = vmatpush1.msra.mxu0 0.0
    %1724 = vmatprep.subr.mxu0 0.0
    %1725 = vmatpush1.msra.mxu0 0.0
    %1726 = vmatprep.subr.mxu0 0.0
    %1727 = vmatpush1.msra.mxu0 0.0
    %1728 = vmatprep.subr.mxu0 0.0
    %1729 = vmatpush1.msra.mxu0 0.0
    %1730 = vmatprep.subr.mxu0 0.0
    %1731 = vmatpush1.msra.mxu0 0.0
    %1732 = vmatprep.subr.mxu0 0.0
    %1733 = vmatpush1.msra.mxu0 0.0
    %1734 = vmatprep.subr.mxu0 0.0
    %1735 = vmatpush1.msra.mxu0 0.0
    %1736 = vmatprep.subr.mxu0 0.0
    %1737 = vmatpush1.msra.mxu0 0.0
    %1738 = vmatprep.subr.mxu0 0.0
    %1739 = vmatpush1.msra.mxu0 0.0
    %1740 = vmatprep.subr.mxu0 0.0
    %1741 = vmatpush1.msra.mxu0 0.0
    %1742 = vmatprep.subr.mxu0 0.0
    %1743 = vmatpush1.msra.mxu0 0.0
    %1744 = vmatprep.subr.mxu0 0.0
    %1745 = vmatpush1.msra.mxu0 0.0
    %1746 = vmatprep.mubr.f32.mxu0 0.0
    %1747 = vmatmul.mubr.f32.gmra.mrb[0].mxu0 %v1610
    %v1748 = vpop.f32.mrb[0].mxu0
    %v1749 = vadd.f32 0.0, %v1748
    %v1750 = vpop.f32.mrb[0].mxu0
    %v1751 = vadd.f32 0.0, %v1750
    %1752 = vdwg.mxu0
    %v1753 = vadd.f32 %v550, %v1678
    %v1754 = vadd.f32 %v552, %v1680
    %v1755 = vadd.f32 %v663, %v1749
    %v1756 = vadd.f32 %v665, %v1751
    %v1757 = vxor.u32 %v1753, 2147483648
    %v1758 = vmul.f32 %v1757, 1.442695
    %v1759 = vpow.pop %v1758
    %v1760 = vadd.f32 %v1759, 1.0
    %v1761 = vrcp.pop %v1760
    %v1762 = vmul.f32 1.0, %v1761
    %v1763 = vxor.u32 %v1754, 2147483648
    %v1764 = vmul.f32 %v1763, 1.442695
    %v1765 = vpow.pop %v1764
    %v1766 = vadd.f32 %v1765, 1.0
    %v1767 = vrcp.pop %v1766
    %v1768 = vmul.f32 1.0, %v1767
    %v1769 = vtanh.pop %v1755
    %v1770 = vxor.u32 %v1756, 2147483648
    %v1771 = vmul.f32 %v1770, 1.442695
    %v1772 = vpow.pop %v1771
    %v1773 = vadd.f32 %v1772, 1.0
    %v1774 = vrcp.pop %v1773
    %v1775 = vmul.f32 1.0, %v1774
    %v1776 = vmul.f32 %v1768, %v1608
    %v1777 = vmul.f32 %v1762, %v1769
    %v1778 = vadd.f32 %v1776, %v1777
    %v1779 = vtanh.pop %v1778
    %v1780 = vmul.f32 %v1775, %v1779
    %1781 = vmatprep.subr.mxu0 %v674
    %1782 = vmatpush1.msra.mxu0 %v673
    %1783 = vmatprep.subr.mxu0 %v678
    %1784 = vmatpush1.msra.mxu0 %v677
    %1785 = vmatprep.subr.mxu0 %v682
    %1786 = vmatpush1.msra.mxu0 %v681
    %1787 = vmatprep.subr.mxu0 %v686
    %1788 = vmatpush1.msra.mxu0 %v685
    %1789 = vmatprep.subr.mxu0 %v690
    %1790 = vmatpush1.msra.mxu0 %v689
    %1791 = vmatprep.subr.mxu0 %v694
    %1792 = vmatpush1.msra.mxu0 %v693
    %1793 = vmatprep.subr.mxu0 %v698
    %1794 = vmatpush1.msra.mxu0 %v697
    %1795 = vmatprep.subr.mxu0 %v702
    %1796 = vmatpush1.msra.mxu0 %v701
    %1797 = vmatprep.subr.mxu0 %v706
    %1798 = vmatpush1.msra.mxu0 %v705
    %1799 = vmatprep.subr.mxu0 %v710
    %1800 = vmatpush1.msra.mxu0 %v709
    %1801 = vmatprep.subr.mxu0 %v714
    %1802 = vmatpush1.msra.mxu0 %v713
    %1803 = vmatprep.subr.mxu0 %v718
    %1804 = vmatpush1.msra.mxu0 %v717
    %1805 = vmatprep.subr.mxu0 %v722
    %1806 = vmatpush1.msra.mxu0 %v721
    %1807 = vmatprep.subr.mxu0 %v726
    %1808 = vmatpush1.msra.mxu0 %v725
    %1809 = vmatprep.subr.mxu0 %v730
    %1810 = vmatpush1.msra.mxu0 %v729
    %1811 = vmatprep.subr.mxu0 %v734
    %1812 = vmatpush1.msra.mxu0 %v733
    %1813 = vmatprep.subr.mxu0 0.0
    %1814 = vmatpush1.msra.mxu0 0.0
    %1815 = vmatprep.subr.mxu0 0.0
    %1816 = vmatpush1.msra.mxu0 0.0
    %1817 = vmatprep.subr.mxu0 0.0
    %1818 = vmatpush1.msra.mxu0 0.0
    %1819 = vmatprep.subr.mxu0 0.0
    %1820 = vmatpush1.msra.mxu0 0.0
    %1821 = vmatprep.subr.mxu0 0.0
    %1822 = vmatpush1.msra.mxu0 0.0
    %1823 = vmatprep.subr.mxu0 0.0
    %1824 = vmatpush1.msra.mxu0 0.0
    %1825 = vmatprep.subr.mxu0 0.0
    %1826 = vmatpush1.msra.mxu0 0.0
    %1827 = vmatprep.subr.mxu0 0.0
    %1828 = vmatpush1.msra.mxu0 0.0
    %1829 = vmatprep.subr.mxu0 0.0
    %1830 = vmatpush1.msra.mxu0 0.0
    %1831 = vmatprep.subr.mxu0 0.0
    %1832 = vmatpush1.msra.mxu0 0.0
    %1833 = vmatprep.subr.mxu0 0.0
    %1834 = vmatpush1.msra.mxu0 0.0
    %1835 = vmatprep.subr.mxu0 0.0
    %1836 = vmatpush1.msra.mxu0 0.0
    %1837 = vmatprep.subr.mxu0 0.0
    %1838 = vmatpush1.msra.mxu0 0.0
    %1839 = vmatprep.subr.mxu0 0.0
    %1840 = vmatpush1.msra.mxu0 0.0
    %1841 = vmatprep.subr.mxu0 0.0
    %1842 = vmatpush1.msra.mxu0 0.0
    %1843 = vmatprep.subr.mxu0 0.0
    %1844 = vmatpush1.msra.mxu0 0.0
    %1845 = vmatprep.mubr.f32.mxu0 0.0
    %1846 = vmatmul.mubr.f32.gmra.mrb[0].mxu0 %v1780
    %v1847 = vpop.f32.mrb[0].mxu0
    %v1848 = vadd.f32 0.0, %v1847
    %v1849 = vpop.f32.mrb[0].mxu0
    %v1850 = vadd.f32 0.0, %v1849
    %1851 = vdwg.mxu0
    %1852 = vmatprep.subr.mxu0 %v676
    %1853 = vmatpush1.msra.mxu0 %v675
    %1854 = vmatprep.subr.mxu0 %v680
    %1855 = vmatpush1.msra.mxu0 %v679
    %1856 = vmatprep.subr.mxu0 %v684
    %1857 = vmatpush1.msra.mxu0 %v683
    %1858 = vmatprep.subr.mxu0 %v688
    %1859 = vmatpush1.msra.mxu0 %v687
    %1860 = vmatprep.subr.mxu0 %v692
    %1861 = vmatpush1.msra.mxu0 %v691
    %1862 = vmatprep.subr.mxu0 %v696
    %1863 = vmatpush1.msra.mxu0 %v695
    %1864 = vmatprep.subr.mxu0 %v700
    %1865 = vmatpush1.msra.mxu0 %v699
    %1866 = vmatprep.subr.mxu0 %v704
    %1867 = vmatpush1.msra.mxu0 %v703
    %1868 = vmatprep.subr.mxu0 %v708
    %1869 = vmatpush1.msra.mxu0 %v707
    %1870 = vmatprep.subr.mxu0 %v712
    %1871 = vmatpush1.msra.mxu0 %v711
    %1872 = vmatprep.subr.mxu0 %v716
    %1873 = vmatpush1.msra.mxu0 %v715
    %1874 = vmatprep.subr.mxu0 %v720
    %1875 = vmatpush1.msra.mxu0 %v719
    %1876 = vmatprep.subr.mxu0 %v724
    %1877 = vmatpush1.msra.mxu0 %v723
    %1878 = vmatprep.subr.mxu0 %v728
    %1879 = vmatpush1.msra.mxu0 %v727
    %1880 = vmatprep.subr.mxu0 %v732
    %1881 = vmatpush1.msra.mxu0 %v731
    %1882 = vmatprep.subr.mxu0 %v736
    %1883 = vmatpush1.msra.mxu0 %v735
    %1884 = vmatprep.subr.mxu0 0.0
    %1885 = vmatpush1.msra.mxu0 0.0
    %1886 = vmatprep.subr.mxu0 0.0
    %1887 = vmatpush1.msra.mxu0 0.0
    %1888 = vmatprep.subr.mxu0 0.0
    %1889 = vmatpush1.msra.mxu0 0.0
    %1890 = vmatprep.subr.mxu0 0.0
    %1891 = vmatpush1.msra.mxu0 0.0
    %1892 = vmatprep.subr.mxu0 0.0
    %1893 = vmatpush1.msra.mxu0 0.0
    %1894 = vmatprep.subr.mxu0 0.0
    %1895 = vmatpush1.msra.mxu0 0.0
    %1896 = vmatprep.subr.mxu0 0.0
    %1897 = vmatpush1.msra.mxu0 0.0
    %1898 = vmatprep.subr.mxu0 0.0
    %1899 = vmatpush1.msra.mxu0 0.0
    %1900 = vmatprep.subr.mxu0 0.0
    %1901 = vmatpush1.msra.mxu0 0.0
    %1902 = vmatprep.subr.mxu0 0.0
    %1903 = vmatpush1.msra.mxu0 0.0
    %1904 = vmatprep.subr.mxu0 0.0
    %1905 = vmatpush1.msra.mxu0 0.0
    %1906 = vmatprep.subr.mxu0 0.0
    %1907 = vmatpush1.msra.mxu0 0.0
    %1908 = vmatprep.subr.mxu0 0.0
    %1909 = vmatpush1.msra.mxu0 0.0
    %1910 = vmatprep.subr.mxu0 0.0
    %1911 = vmatpush1.msra.mxu0 0.0
    %1912 = vmatprep.subr.mxu0 0.0
    %1913 = vmatpush1.msra.mxu0 0.0
    %1914 = vmatprep.subr.mxu0 0.0
    %1915 = vmatpush1.msra.mxu0 0.0
    %1916 = vmatprep.mubr.f32.mxu0 0.0
    %1917 = vmatmul.mubr.f32.gmra.mrb[0].mxu0 %v1780
    %v1918 = vpop.f32.mrb[0].mxu0
    %v1919 = vadd.f32 0.0, %v1918
    %v1920 = vpop.f32.mrb[0].mxu0
    %v1921 = vadd.f32 0.0, %v1920
    %1922 = vdwg.mxu0
    %v1923 = vadd.f32 %v556, %v1848
    %v1924 = vadd.f32 %v558, %v1850
    %v1925 = vadd.f32 %v669, %v1919
    %v1926 = vadd.f32 %v671, %v1921
    %v1927 = vxor.u32 %v1923, 2147483648
    %v1928 = vmul.f32 %v1927, 1.442695
    %v1929 = vpow.pop %v1928
    %v1930 = vadd.f32 %v1929, 1.0
    %v1931 = vrcp.pop %v1930
    %v1932 = vmul.f32 1.0, %v1931
    %v1933 = vxor.u32 %v1924, 2147483648
    %v1934 = vmul.f32 %v1933, 1.442695
    %v1935 = vpow.pop %v1934
    %v1936 = vadd.f32 %v1935, 1.0
    %v1937 = vrcp.pop %v1936
    %v1938 = vmul.f32 1.0, %v1937
    %v1939 = vtanh.pop %v1925
    %v1940 = vxor.u32 %v1926, 2147483648
    %v1941 = vmul.f32 %v1940, 1.442695
    %v1942 = vpow.pop %v1941
    %v1943 = vadd.f32 %v1942, 1.0
    %v1944 = vrcp.pop %v1943
    %v1945 = vmul.f32 1.0, %v1944
    %v1946 = vmul.f32 %v1938, %v1778
    %v1947 = vmul.f32 %v1932, %v1939
    %v1948 = vadd.f32 %v1946, %v1947
    %v1949 = vtanh.pop %v1948
    %v1950 = vmul.f32 %v1945, %v1949
    %v1951 = vld [vmem:[%s6] sm:$0xff]
    %v1952 = vld [vmem:[%s6 + $0x8] sm:$0xff]
    %v1953 = vld [vmem:[%s6 + $0x10] sm:$0xff]
    %v1954 = vld [vmem:[%s6 + $0x18] sm:$0xff]
    %v1955 = vld [vmem:[%s6 + $0x20] sm:$0xff]
    %v1956 = vld [vmem:[%s6 + $0x28] sm:$0xff]
    %v1957 = vld [vmem:[%s6 + $0x30] sm:$0xff]
    %v1958 = vld [vmem:[%s6 + $0x38] sm:$0xff]
    %v1959 = vld [vmem:[%s6 + $0x40] sm:$0xff]
    %v1960 = vld [vmem:[%s6 + $0x48] sm:$0xff]
    %v1961 = vld [vmem:[%s6 + $0x50] sm:$0xff]
    %v1962 = vld [vmem:[%s6 + $0x58] sm:$0xff]
    %v1963 = vld [vmem:[%s6 + $0x60] sm:$0xff]
    %v1964 = vld [vmem:[%s6 + $0x68] sm:$0xff]
    %v1965 = vld [vmem:[%s6 + $0x70] sm:$0xff]
    %v1966 = vld [vmem:[%s6 + $0x78] sm:$0xff]
    %1967 = vmatprep.subr.mxu0 0.0
    %1968 = vmatpush1.msra.mxu0 %v1951
    %1969 = vmatprep.subr.mxu0 0.0
    %1970 = vmatpush1.msra.mxu0 %v1952
    %1971 = vmatprep.subr.mxu0 0.0
    %1972 = vmatpush1.msra.mxu0 %v1953
    %1973 = vmatprep.subr.mxu0 0.0
    %1974 = vmatpush1.msra.mxu0 %v1954
    %1975 = vmatprep.subr.mxu0 0.0
    %1976 = vmatpush1.msra.mxu0 %v1955
    %1977 = vmatprep.subr.mxu0 0.0
    %1978 = vmatpush1.msra.mxu0 %v1956
    %1979 = vmatprep.subr.mxu0 0.0
    %1980 = vmatpush1.msra.mxu0 %v1957
    %1981 = vmatprep.subr.mxu0 0.0
    %1982 = vmatpush1.msra.mxu0 %v1958
    %1983 = vmatprep.subr.mxu0 0.0
    %1984 = vmatpush1.msra.mxu0 %v1959
    %1985 = vmatprep.subr.mxu0 0.0
    %1986 = vmatpush1.msra.mxu0 %v1960
    %1987 = vmatprep.subr.mxu0 0.0
    %1988 = vmatpush1.msra.mxu0 %v1961
    %1989 = vmatprep.subr.mxu0 0.0
    %1990 = vmatpush1.msra.mxu0 %v1962
    %1991 = vmatprep.subr.mxu0 0.0
    %1992 = vmatpush1.msra.mxu0 %v1963
    %1993 = vmatprep.subr.mxu0 0.0
    %1994 = vmatpush1.msra.mxu0 %v1964
    %1995 = vmatprep.subr.mxu0 0.0
    %1996 = vmatpush1.msra.mxu0 %v1965
    %1997 = vmatprep.subr.mxu0 0.0
    %1998 = vmatpush1.msra.mxu0 %v1966
    %1999 = vmatprep.subr.mxu0 0.0
    %2000 = vmatpush1.msra.mxu0 0.0
    %2001 = vmatprep.subr.mxu0 0.0
    %2002 = vmatpush1.msra.mxu0 0.0
    %2003 = vmatprep.subr.mxu0 0.0
    %2004 = vmatpush1.msra.mxu0 0.0
    %2005 = vmatprep.subr.mxu0 0.0
    %2006 = vmatpush1.msra.mxu0 0.0
    %2007 = vmatprep.subr.mxu0 0.0
    %2008 = vmatpush1.msra.mxu0 0.0
    %2009 = vmatprep.subr.mxu0 0.0
    %2010 = vmatpush1.msra.mxu0 0.0
    %2011 = vmatprep.subr.mxu0 0.0
    %2012 = vmatpush1.msra.mxu0 0.0
    %2013 = vmatprep.subr.mxu0 0.0
    %2014 = vmatpush1.msra.mxu0 0.0
    %2015 = vmatprep.subr.mxu0 0.0
    %2016 = vmatpush1.msra.mxu0 0.0
    %2017 = vmatprep.subr.mxu0 0.0
    %2018 = vmatpush1.msra.mxu0 0.0
    %2019 = vmatprep.subr.mxu0 0.0
    %2020 = vmatpush1.msra.mxu0 0.0
    %2021 = vmatprep.subr.mxu0 0.0
    %2022 = vmatpush1.msra.mxu0 0.0
    %2023 = vmatprep.subr.mxu0 0.0
    %2024 = vmatpush1.msra.mxu0 0.0
    %2025 = vmatprep.subr.mxu0 0.0
    %2026 = vmatpush1.msra.mxu0 0.0
    %2027 = vmatprep.subr.mxu0 0.0
    %2028 = vmatpush1.msra.mxu0 0.0
    %2029 = vmatprep.subr.mxu0 0.0
    %2030 = vmatpush1.msra.mxu0 0.0
    %2031 = vmatprep.mubr.f32.mxu0 0.0
    %2032 = vmatmul.mubr.f32.gmra.mrb[0].mxu0 %v1950
    %v2033 = vpop.f32.mrb[0].mxu0
    %v2034 = vadd.f32 0.0, %v2033
    %v2035 = vpop.f32.mrb[0].mxu0
    %2036 = vdwg.mxu0
    %v2037 = vadd.f32 %v397, %v2034
    %2038 = vst [vmem:[%s9] sm:$0xff] %v2037
    // Predicated region
    $region66: #{bilstm_forward.1} parent=1 // pred_check
      _
    $region67: #{bilstm_forward.1} parent=1 // pred_check_branch
      %2040 = sbr.rel (0) target = $region69
    $region68: #{bilstm_forward.1} parent=1 // pred_region
      _
    $region69: #{bilstm_forward.1} parent=1 // pred_fallthru
      _
    // Predicated region
    $region70: #{bilstm_forward.1} parent=1 // pred_check
      _
    $region71: #{bilstm_forward.1} parent=1 // pred_check_branch
      %2042 = sbr.rel (0) target = $region73
    $region72: #{bilstm_forward.1} parent=1 // pred_region
      _
    $region73: #{bilstm_forward.1} parent=1 // pred_fallthru
      _
    %2043 = vsyncpa [#allocation3], 1
    %2044 = vsyncpa [#allocation5], 1
    %2045 = vsyncpa [#allocation8], 1
    %2046 = vsyncpa [#allocation11], 1

</llo_original>
